<compile_context>
chip_gen: v7x
topology: tpu7x:2x2x1
jax: 0.10.0
libtpu: 0.0.40
codegen_flags: <defaults>
</compile_context>

<pallas_src>
import numpy as np
import jax
import jax.numpy as jnp
from jax.experimental import pallas as pl
from jax.experimental.pallas import tpu as pltpu

LANE = 128  # TPU lane width; only the final output is padded to 128 lanes.


# ----------------------------------------------------------------------------- model topology
def make_discriminator_configs(input_size, input_dim, dim):
    """Replicates Discriminator.__init__ layer topology (d_fully_connected=False)."""
    cfgs = [(input_dim, dim, 4, 2, 1, "leakyReLU")]
    n_downsample = 0
    while input_size > 8:
        input_size = int(input_size / 2)
        n_downsample += 1
    cur = dim
    for _ in range(n_downsample):
        nxt = min(cur * 2, 512)
        cfgs.append((cur, nxt, 4, 2, 1, "leakyReLU"))
        cur = nxt
    cfgs.append((cur, 1, 4, 1, 0, "none"))
    return cfgs


def init_discriminator_params(key, input_size, input_dim, dim):
    params = []
    for (ci, co, k, st, p, act) in make_discriminator_configs(input_size, input_dim, dim):
        key, wk, bk = jax.random.split(key, 3)
        w = 0.1 * jax.random.normal(wk, (co, ci, k, k), jnp.float32)
        b = 0.1 * jax.random.normal(bk, (co,), jnp.float32)
        params.append(dict(w=w, b=b, stride=st, pad=p, act=act))
    return params


# ----------------------------------------------------------------------------- one-time weight packing
def pack_discriminator(params, input_size, input_dim, last_activation):
    """Repack PyTorch-style OIHW weights into the fused kernel's constant operands.

    For each layer (kernel k, stride s, pad p) build, for every kh in [0, k):
      RS[kh]  : [Ho, H]                     0/1 row selection, 1 iff h == s*ho + kh - p
      V[kh]   : [W*Cin, lanes_out]          V[kh][w*Cin + c, wo*Cout + co] = W[co, c, kh, kw],
                                            kw = (w + p) - s*wo  (zero elsewhere)
      bias_row: [1, lanes_out]              bias tiled over wo, zero in lane padding
    lanes_out = Wo*Cout except for the last layer, where it is padded to 128 so the
    final store is lane-dense.  Conv zero padding is implicit: out-of-range rows/cols
    simply have no 1 / weight entry, so they contribute 0.
    """
    H = W = input_size
    C = input_dim
    layers = []
    n = len(params)
    for idx, p in enumerate(params):
        w = np.asarray(p["w"], np.float32)
        b = np.asarray(p["b"], np.float32)
        stride, pad = int(p["stride"]), int(p["pad"])
        Cout, Cin, k, _ = w.shape
        assert Cin == C
        Ho = (H + 2 * pad - k) // stride + 1
        Wo = (W + 2 * pad - k) // stride + 1
        lanes_in = W * Cin
        lanes_out = LANE if idx == n - 1 else Wo * Cout   # last layer: lane-dense store
        assert lanes_in <= LANE and Wo * Cout <= lanes_out <= LANE, \
            "single-vreg-wide slab layout only"

        rs = np.zeros((k, Ho, H), np.float32)
        for kh in range(k):
            for ho in range(Ho):
                h = stride * ho + kh - pad
                if 0 <= h < H:
                    rs[kh, ho, h] = 1.0

        v = np.zeros((k, lanes_in, lanes_out), np.float32)
        for kh in range(k):
            for wo in range(Wo):
                for kw in range(k):
                    wi = stride * wo + kw - pad
                    if 0 <= wi < W:
                        v[kh, wi * Cin:(wi + 1) * Cin, wo * Cout:(wo + 1) * Cout] = \
                            w[:, :, kh, kw].T
        bias_row = np.zeros((1, lanes_out), np.float32)
        bias_row[0, :Wo * Cout] = np.tile(b, Wo)

        act = p["act"]
        if idx == n - 1 and last_activation == "sigmoid":
            act = "sigmoid"  # fuse trailing nn.Sigmoid into the last conv stage

        layers.append(dict(rs=jnp.asarray(rs), v=jnp.asarray(v), b=jnp.asarray(bias_row),
                           act=act, k=k, h_in=H, h_out=Ho, w_out=Wo, c_out=Cout,
                           lanes_in=lanes_in, lanes_out=lanes_out))
        H, W, C = Ho, Wo, Cout
    return layers


# ----------------------------------------------------------------------------- fused kernel
def _make_fused_kernel(acts):
    n_layers = len(acts)

    def kernel(x_ref, *refs):
        o_ref = refs[-1]
        a = x_ref[0]                                     # [H0, W0*C0] slab for this image
        for li in range(n_layers):
            rs_ref = refs[3 * li]                        # [k, Ho, Hin]
            v_ref = refs[3 * li + 1]                     # [k, lanes_in, lanes_out]
            b_ref = refs[3 * li + 2]                     # [1, lanes_out]
            k, ho = rs_ref.shape[0], rs_ref.shape[1]
            lanes_out = v_ref.shape[2]
            acc = jnp.zeros((ho, lanes_out), jnp.float32)
            for kh in range(k):                          # static unroll (k == 4)
                rows = jnp.dot(rs_ref[kh], a, preferred_element_type=jnp.float32)
                acc = acc + jnp.dot(rows, v_ref[kh], preferred_element_type=jnp.float32)
            y = acc + b_ref[...]
            act = acts[li]
            if act == "leakyReLU":
                y = jnp.where(y >= 0.0, y, 0.2 * y)      # PyTorch LeakyReLU(0.2)
            elif act == "sigmoid":
                # exact form kept (vs pl.reciprocal(approx=True)) so the 1e-4
                # reference check stays tight; a few lanes -> negligible either way.
                y = 1.0 / (1.0 + jnp.exp(-y))
            a = y
        o_ref[...] = a.reshape(o_ref.shape)

    return kernel


def discriminator_forward(x_nchw, packed):
    N, C, H, W = x_nchw.shape
    lanes_in0 = W * C
    assert lanes_in0 <= LANE

    # NCHW -> per-image [H, W*C] slab (no im2col, no k*k duplication, no lane padding).
    a0 = jnp.transpose(x_nchw, (0, 2, 3, 1)).reshape(N, H, lanes_in0)

    last = packed[-1]
    ho_last, wo_last, c_last = last["h_out"], last["w_out"], last["c_out"]
    lanes_out_last = last["lanes_out"]

    inputs = [a0]
    in_specs = [pl.BlockSpec((1, H, lanes_in0), lambda n: (n, 0, 0))]
    for L in packed:
        inputs += [L["rs"], L["v"], L["b"]]
        in_specs += [pl.BlockSpec(L["rs"].shape, lambda n: (0, 0, 0)),
                     pl.BlockSpec(L["v"].shape, lambda n: (0, 0, 0)),
                     pl.BlockSpec(L["b"].shape, lambda n: (0, 0))]

    # Advisory cost estimate so XLA does not pessimistically schedule the tiny call.
    flops = 0
    for L in packed:
        k, ho, hin = L["rs"].shape
        flops += k * (2 * ho * hin * L["lanes_in"] + 2 * ho * L["lanes_in"] * L["lanes_out"])
    flops *= N
    trans = N * ho_last * lanes_out_last if packed[-1]["act"] == "sigmoid" else 0
    bytes_accessed = int(a0.size * 4 + N * ho_last * lanes_out_last * 4 +
                         sum(L["rs"].size + L["v"].size + L["b"].size for L in packed) * 4)

    kernel = _make_fused_kernel([L["act"] for L in packed])
    out = pl.pallas_call(
        kernel,
        out_shape=jax.ShapeDtypeStruct((N, ho_last, lanes_out_last), jnp.float32),
        grid=(N,),                                         # batch axis -> megacore parallel
        in_specs=in_specs,
        out_specs=pl.BlockSpec((1, ho_last, lanes_out_last), lambda n: (n, 0, 0)),
        compiler_params=pltpu.CompilerParams(dimension_semantics=("parallel",)),
        cost_estimate=pl.CostEstimate(flops=int(flops), transcendentals=int(trans),
                                      bytes_accessed=bytes_accessed),
    )(*inputs)

    out = out[:, :, :wo_last * c_last]                     # drop lane padding
    out = out.reshape(N, ho_last, wo_last, c_last).transpose(0, 3, 1, 2)   # back to NCHW
    return out


# ----------------------------------------------------------------------------- reference (plain JAX)
def _ref_forward(x, params, last_activation):
    y = x
    n = len(params)
    for idx, p in enumerate(params):
        y = jax.lax.conv_general_dilated(
            y, p["w"], (p["stride"], p["stride"]),
            [(p["pad"], p["pad"]), (p["pad"], p["pad"])],
            dimension_numbers=("NCHW", "OIHW", "NCHW"),
        ) + p["b"].reshape(1, -1, 1, 1)
        act = p["act"]
        if idx == n - 1 and last_activation == "sigmoid":
            act = "sigmoid"
        if act == "leakyReLU":
            y = jnp.where(y >= 0.0, y, 0.2 * y)
        elif act == "sigmoid":
            y = jax.nn.sigmoid(y)
    return y


# ----------------------------------------------------------------------------- main
if __name__ == "__main__":
    key = jax.random.PRNGKey(0)
    key, xk = jax.random.split(key)

    # N=2, input_dim=4, input_size=16, dim=8 (small shapes consistent with the module)
    x = jax.random.normal(xk, (2, 4, 16, 16), jnp.float32)
    params = init_discriminator_params(key, input_size=16, input_dim=4, dim=8)
    packed = pack_discriminator(params, input_size=16, input_dim=4,
                                last_activation="sigmoid")

    fwd = jax.jit(lambda xx: discriminator_forward(xx, packed))
    out = jax.block_until_ready(fwd(x))
    assert out.shape == (2, 1, 1, 1), out.shape

    ref = _ref_forward(x, params, last_activation="sigmoid")
    assert jnp.allclose(out, ref, atol=1e-4, rtol=1e-4), (out, ref)

    print("KERNEL_OK")
</pallas_src>

<mosaic_0001>
module attributes {stable_mosaic.version = 11 : i64} {
  func.func @kernel(%arg0: i32, %arg1: memref<1x16x64xf32, #tpu.memory_space<vmem>>, %arg2: memref<4x8x16xf32, #tpu.memory_space<vmem>>, %arg3: memref<4x64x64xf32, #tpu.memory_space<vmem>>, %arg4: memref<1x64xf32, #tpu.memory_space<vmem>>, %arg5: memref<4x4x8xf32, #tpu.memory_space<vmem>>, %arg6: memref<4x64x64xf32, #tpu.memory_space<vmem>>, %arg7: memref<1x64xf32, #tpu.memory_space<vmem>>, %arg8: memref<4x1x4xf32, #tpu.memory_space<vmem>>, %arg9: memref<4x64x128xf32, #tpu.memory_space<vmem>>, %arg10: memref<1x128xf32, #tpu.memory_space<vmem>>, %arg11: memref<1x1x128xf32, #tpu.memory_space<vmem>>) attributes {dimension_semantics = [#tpu.dimension_semantics<parallel>], iteration_bounds = array<i64: 2>, scalar_prefetch = 0 : i64, scratch_operands = 0 : i64, tpu.core_type = #tpu.core_type<tc>, window_params = [{transform_indices = @transform_0, window_bounds = array<i64: 1, 16, 64>}, {pipeline_mode = #tpu.pipeline_mode<synchronous>, transform_indices = @transform_1, window_bounds = array<i64: 4, 8, 16>}, {pipeline_mode = #tpu.pipeline_mode<synchronous>, transform_indices = @transform_2, window_bounds = array<i64: 4, 64, 64>}, {pipeline_mode = #tpu.pipeline_mode<synchronous>, transform_indices = @transform_3, window_bounds = array<i64: 1, 64>}, {pipeline_mode = #tpu.pipeline_mode<synchronous>, transform_indices = @transform_4, window_bounds = array<i64: 4, 4, 8>}, {pipeline_mode = #tpu.pipeline_mode<synchronous>, transform_indices = @transform_5, window_bounds = array<i64: 4, 64, 64>}, {pipeline_mode = #tpu.pipeline_mode<synchronous>, transform_indices = @transform_6, window_bounds = array<i64: 1, 64>}, {pipeline_mode = #tpu.pipeline_mode<synchronous>, transform_indices = @transform_7, window_bounds = array<i64: 4, 1, 4>}, {pipeline_mode = #tpu.pipeline_mode<synchronous>, transform_indices = @transform_8, window_bounds = array<i64: 4, 64, 128>}, {pipeline_mode = #tpu.pipeline_mode<synchronous>, transform_indices = @transform_9, window_bounds = array<i64: 1, 128>}, {transform_indices = @transform_10, window_bounds = array<i64: 1, 1, 128>}]} {
    %c0 = arith.constant 0 : index
    %c0_0 = arith.constant 0 : index
    %c0_1 = arith.constant 0 : index
    %0 = vector.load %arg1[%c0, %c0_0, %c0_1] : memref<1x16x64xf32, #tpu.memory_space<vmem>>, vector<1x16x64xf32>
    %1 = vector.shape_cast %0 : vector<1x16x64xf32> to vector<16x64xf32>
    %cst = arith.constant 0.000000e+00 : f32
    %2 = vector.broadcast %cst : f32 to vector<8x64xf32>
    %c0_2 = arith.constant 0 : index
    %c0_3 = arith.constant 0 : index
    %c0_4 = arith.constant 0 : index
    %3 = vector.load %arg2[%c0_2, %c0_3, %c0_4] : memref<4x8x16xf32, #tpu.memory_space<vmem>>, vector<1x8x16xf32>
    %4 = vector.shape_cast %3 : vector<1x8x16xf32> to vector<8x16xf32>
    %cst_5 = arith.constant dense<0.000000e+00> : vector<8x64xf32>
    %5 = tpu.matmul %4, %1, %cst_5 {dimension_numbers = #tpu.dot_dimension_numbers<[1], [0], [0], [1], [0, 0, 1, 1], [], []>} : vector<8x16xf32>, vector<16x64xf32>, vector<8x64xf32> -> vector<8x64xf32>
    %c0_6 = arith.constant 0 : index
    %c0_7 = arith.constant 0 : index
    %c0_8 = arith.constant 0 : index
    %6 = vector.load %arg3[%c0_6, %c0_7, %c0_8] : memref<4x64x64xf32, #tpu.memory_space<vmem>>, vector<1x64x64xf32>
    %7 = vector.shape_cast %6 : vector<1x64x64xf32> to vector<64x64xf32>
    %cst_9 = arith.constant dense<0.000000e+00> : vector<8x64xf32>
    %8 = tpu.matmul %5, %7, %cst_9 {dimension_numbers = #tpu.dot_dimension_numbers<[1], [0], [0], [1], [0, 0, 1, 1], [], []>} : vector<8x64xf32>, vector<64x64xf32>, vector<8x64xf32> -> vector<8x64xf32>
    %9 = arith.addf %2, %8 : vector<8x64xf32>
    %c1 = arith.constant 1 : index
    %c0_10 = arith.constant 0 : index
    %c0_11 = arith.constant 0 : index
    %10 = vector.load %arg2[%c1, %c0_10, %c0_11] : memref<4x8x16xf32, #tpu.memory_space<vmem>>, vector<1x8x16xf32>
    %11 = vector.shape_cast %10 : vector<1x8x16xf32> to vector<8x16xf32>
    %cst_12 = arith.constant dense<0.000000e+00> : vector<8x64xf32>
    %12 = tpu.matmul %11, %1, %cst_12 {dimension_numbers = #tpu.dot_dimension_numbers<[1], [0], [0], [1], [0, 0, 1, 1], [], []>} : vector<8x16xf32>, vector<16x64xf32>, vector<8x64xf32> -> vector<8x64xf32>
    %c1_13 = arith.constant 1 : index
    %c0_14 = arith.constant 0 : index
    %c0_15 = arith.constant 0 : index
    %13 = vector.load %arg3[%c1_13, %c0_14, %c0_15] : memref<4x64x64xf32, #tpu.memory_space<vmem>>, vector<1x64x64xf32>
    %14 = vector.shape_cast %13 : vector<1x64x64xf32> to vector<64x64xf32>
    %cst_16 = arith.constant dense<0.000000e+00> : vector<8x64xf32>
    %15 = tpu.matmul %12, %14, %cst_16 {dimension_numbers = #tpu.dot_dimension_numbers<[1], [0], [0], [1], [0, 0, 1, 1], [], []>} : vector<8x64xf32>, vector<64x64xf32>, vector<8x64xf32> -> vector<8x64xf32>
    %16 = arith.addf %9, %15 : vector<8x64xf32>
    %c2 = arith.constant 2 : index
    %c0_17 = arith.constant 0 : index
    %c0_18 = arith.constant 0 : index
    %17 = vector.load %arg2[%c2, %c0_17, %c0_18] : memref<4x8x16xf32, #tpu.memory_space<vmem>>, vector<1x8x16xf32>
    %18 = vector.shape_cast %17 : vector<1x8x16xf32> to vector<8x16xf32>
    %cst_19 = arith.constant dense<0.000000e+00> : vector<8x64xf32>
    %19 = tpu.matmul %18, %1, %cst_19 {dimension_numbers = #tpu.dot_dimension_numbers<[1], [0], [0], [1], [0, 0, 1, 1], [], []>} : vector<8x16xf32>, vector<16x64xf32>, vector<8x64xf32> -> vector<8x64xf32>
    %c2_20 = arith.constant 2 : index
    %c0_21 = arith.constant 0 : index
    %c0_22 = arith.constant 0 : index
    %20 = vector.load %arg3[%c2_20, %c0_21, %c0_22] : memref<4x64x64xf32, #tpu.memory_space<vmem>>, vector<1x64x64xf32>
    %21 = vector.shape_cast %20 : vector<1x64x64xf32> to vector<64x64xf32>
    %cst_23 = arith.constant dense<0.000000e+00> : vector<8x64xf32>
    %22 = tpu.matmul %19, %21, %cst_23 {dimension_numbers = #tpu.dot_dimension_numbers<[1], [0], [0], [1], [0, 0, 1, 1], [], []>} : vector<8x64xf32>, vector<64x64xf32>, vector<8x64xf32> -> vector<8x64xf32>
    %23 = arith.addf %16, %22 : vector<8x64xf32>
    %c3 = arith.constant 3 : index
    %c0_24 = arith.constant 0 : index
    %c0_25 = arith.constant 0 : index
    %24 = vector.load %arg2[%c3, %c0_24, %c0_25] : memref<4x8x16xf32, #tpu.memory_space<vmem>>, vector<1x8x16xf32>
    %25 = vector.shape_cast %24 : vector<1x8x16xf32> to vector<8x16xf32>
    %cst_26 = arith.constant dense<0.000000e+00> : vector<8x64xf32>
    %26 = tpu.matmul %25, %1, %cst_26 {dimension_numbers = #tpu.dot_dimension_numbers<[1], [0], [0], [1], [0, 0, 1, 1], [], []>} : vector<8x16xf32>, vector<16x64xf32>, vector<8x64xf32> -> vector<8x64xf32>
    %c3_27 = arith.constant 3 : index
    %c0_28 = arith.constant 0 : index
    %c0_29 = arith.constant 0 : index
    %27 = vector.load %arg3[%c3_27, %c0_28, %c0_29] : memref<4x64x64xf32, #tpu.memory_space<vmem>>, vector<1x64x64xf32>
    %28 = vector.shape_cast %27 : vector<1x64x64xf32> to vector<64x64xf32>
    %cst_30 = arith.constant dense<0.000000e+00> : vector<8x64xf32>
    %29 = tpu.matmul %26, %28, %cst_30 {dimension_numbers = #tpu.dot_dimension_numbers<[1], [0], [0], [1], [0, 0, 1, 1], [], []>} : vector<8x64xf32>, vector<64x64xf32>, vector<8x64xf32> -> vector<8x64xf32>
    %30 = arith.addf %23, %29 : vector<8x64xf32>
    %c0_31 = arith.constant 0 : index
    %c0_32 = arith.constant 0 : index
    %31 = vector.load %arg4[%c0_31, %c0_32] : memref<1x64xf32, #tpu.memory_space<vmem>>, vector<1x64xf32>
    %32 = vector.broadcast %31 : vector<1x64xf32> to vector<8x64xf32>
    %33 = arith.addf %30, %32 : vector<8x64xf32>
    %cst_33 = arith.constant 0.000000e+00 : f32
    %34 = vector.broadcast %cst_33 : f32 to vector<8x64xf32>
    %35 = arith.cmpf oge, %33, %34 : vector<8x64xf32>
    %cst_34 = arith.constant 2.000000e-01 : f32
    %36 = vector.broadcast %cst_34 : f32 to vector<8x64xf32>
    %37 = arith.mulf %36, %33 : vector<8x64xf32>
    %38 = arith.select %35, %33, %37 : vector<8x64xi1>, vector<8x64xf32>
    %cst_35 = arith.constant 0.000000e+00 : f32
    %39 = vector.broadcast %cst_35 : f32 to vector<4x64xf32>
    %c0_36 = arith.constant 0 : index
    %c0_37 = arith.constant 0 : index
    %c0_38 = arith.constant 0 : index
    %40 = vector.load %arg5[%c0_36, %c0_37, %c0_38] : memref<4x4x8xf32, #tpu.memory_space<vmem>>, vector<1x4x8xf32>
    %41 = vector.shape_cast %40 : vector<1x4x8xf32> to vector<4x8xf32>
    %cst_39 = arith.constant dense<0.000000e+00> : vector<4x64xf32>
    %42 = tpu.matmul %41, %38, %cst_39 {dimension_numbers = #tpu.dot_dimension_numbers<[1], [0], [0], [1], [0, 0, 1, 1], [], []>} : vector<4x8xf32>, vector<8x64xf32>, vector<4x64xf32> -> vector<4x64xf32>
    %c0_40 = arith.constant 0 : index
    %c0_41 = arith.constant 0 : index
    %c0_42 = arith.constant 0 : index
    %43 = vector.load %arg6[%c0_40, %c0_41, %c0_42] : memref<4x64x64xf32, #tpu.memory_space<vmem>>, vector<1x64x64xf32>
    %44 = vector.shape_cast %43 : vector<1x64x64xf32> to vector<64x64xf32>
    %cst_43 = arith.constant dense<0.000000e+00> : vector<4x64xf32>
    %45 = tpu.matmul %42, %44, %cst_43 {dimension_numbers = #tpu.dot_dimension_numbers<[1], [0], [0], [1], [0, 0, 1, 1], [], []>} : vector<4x64xf32>, vector<64x64xf32>, vector<4x64xf32> -> vector<4x64xf32>
    %46 = arith.addf %39, %45 : vector<4x64xf32>
    %c1_44 = arith.constant 1 : index
    %c0_45 = arith.constant 0 : index
    %c0_46 = arith.constant 0 : index
    %47 = vector.load %arg5[%c1_44, %c0_45, %c0_46] : memref<4x4x8xf32, #tpu.memory_space<vmem>>, vector<1x4x8xf32>
    %48 = vector.shape_cast %47 : vector<1x4x8xf32> to vector<4x8xf32>
    %cst_47 = arith.constant dense<0.000000e+00> : vector<4x64xf32>
    %49 = tpu.matmul %48, %38, %cst_47 {dimension_numbers = #tpu.dot_dimension_numbers<[1], [0], [0], [1], [0, 0, 1, 1], [], []>} : vector<4x8xf32>, vector<8x64xf32>, vector<4x64xf32> -> vector<4x64xf32>
    %c1_48 = arith.constant 1 : index
    %c0_49 = arith.constant 0 : index
    %c0_50 = arith.constant 0 : index
    %50 = vector.load %arg6[%c1_48, %c0_49, %c0_50] : memref<4x64x64xf32, #tpu.memory_space<vmem>>, vector<1x64x64xf32>
    %51 = vector.shape_cast %50 : vector<1x64x64xf32> to vector<64x64xf32>
    %cst_51 = arith.constant dense<0.000000e+00> : vector<4x64xf32>
    %52 = tpu.matmul %49, %51, %cst_51 {dimension_numbers = #tpu.dot_dimension_numbers<[1], [0], [0], [1], [0, 0, 1, 1], [], []>} : vector<4x64xf32>, vector<64x64xf32>, vector<4x64xf32> -> vector<4x64xf32>
    %53 = arith.addf %46, %52 : vector<4x64xf32>
    %c2_52 = arith.constant 2 : index
    %c0_53 = arith.constant 0 : index
    %c0_54 = arith.constant 0 : index
    %54 = vector.load %arg5[%c2_52, %c0_53, %c0_54] : memref<4x4x8xf32, #tpu.memory_space<vmem>>, vector<1x4x8xf32>
    %55 = vector.shape_cast %54 : vector<1x4x8xf32> to vector<4x8xf32>
    %cst_55 = arith.constant dense<0.000000e+00> : vector<4x64xf32>
    %56 = tpu.matmul %55, %38, %cst_55 {dimension_numbers = #tpu.dot_dimension_numbers<[1], [0], [0], [1], [0, 0, 1, 1], [], []>} : vector<4x8xf32>, vector<8x64xf32>, vector<4x64xf32> -> vector<4x64xf32>
    %c2_56 = arith.constant 2 : index
    %c0_57 = arith.constant 0 : index
    %c0_58 = arith.constant 0 : index
    %57 = vector.load %arg6[%c2_56, %c0_57, %c0_58] : memref<4x64x64xf32, #tpu.memory_space<vmem>>, vector<1x64x64xf32>
    %58 = vector.shape_cast %57 : vector<1x64x64xf32> to vector<64x64xf32>
    %cst_59 = arith.constant dense<0.000000e+00> : vector<4x64xf32>
    %59 = tpu.matmul %56, %58, %cst_59 {dimension_numbers = #tpu.dot_dimension_numbers<[1], [0], [0], [1], [0, 0, 1, 1], [], []>} : vector<4x64xf32>, vector<64x64xf32>, vector<4x64xf32> -> vector<4x64xf32>
    %60 = arith.addf %53, %59 : vector<4x64xf32>
    %c3_60 = arith.constant 3 : index
    %c0_61 = arith.constant 0 : index
    %c0_62 = arith.constant 0 : index
    %61 = vector.load %arg5[%c3_60, %c0_61, %c0_62] : memref<4x4x8xf32, #tpu.memory_space<vmem>>, vector<1x4x8xf32>
    %62 = vector.shape_cast %61 : vector<1x4x8xf32> to vector<4x8xf32>
    %cst_63 = arith.constant dense<0.000000e+00> : vector<4x64xf32>
    %63 = tpu.matmul %62, %38, %cst_63 {dimension_numbers = #tpu.dot_dimension_numbers<[1], [0], [0], [1], [0, 0, 1, 1], [], []>} : vector<4x8xf32>, vector<8x64xf32>, vector<4x64xf32> -> vector<4x64xf32>
    %c3_64 = arith.constant 3 : index
    %c0_65 = arith.constant 0 : index
    %c0_66 = arith.constant 0 : index
    %64 = vector.load %arg6[%c3_64, %c0_65, %c0_66] : memref<4x64x64xf32, #tpu.memory_space<vmem>>, vector<1x64x64xf32>
    %65 = vector.shape_cast %64 : vector<1x64x64xf32> to vector<64x64xf32>
    %cst_67 = arith.constant dense<0.000000e+00> : vector<4x64xf32>
    %66 = tpu.matmul %63, %65, %cst_67 {dimension_numbers = #tpu.dot_dimension_numbers<[1], [0], [0], [1], [0, 0, 1, 1], [], []>} : vector<4x64xf32>, vector<64x64xf32>, vector<4x64xf32> -> vector<4x64xf32>
    %67 = arith.addf %60, %66 : vector<4x64xf32>
    %c0_68 = arith.constant 0 : index
    %c0_69 = arith.constant 0 : index
    %68 = vector.load %arg7[%c0_68, %c0_69] : memref<1x64xf32, #tpu.memory_space<vmem>>, vector<1x64xf32>
    %69 = vector.broadcast %68 : vector<1x64xf32> to vector<4x64xf32>
    %70 = arith.addf %67, %69 : vector<4x64xf32>
    %cst_70 = arith.constant 0.000000e+00 : f32
    %71 = vector.broadcast %cst_70 : f32 to vector<4x64xf32>
    %72 = arith.cmpf oge, %70, %71 : vector<4x64xf32>
    %cst_71 = arith.constant 2.000000e-01 : f32
    %73 = vector.broadcast %cst_71 : f32 to vector<4x64xf32>
    %74 = arith.mulf %73, %70 : vector<4x64xf32>
    %75 = arith.select %72, %70, %74 : vector<4x64xi1>, vector<4x64xf32>
    %cst_72 = arith.constant 0.000000e+00 : f32
    %76 = vector.broadcast %cst_72 : f32 to vector<1x128xf32>
    %c0_73 = arith.constant 0 : index
    %c0_74 = arith.constant 0 : index
    %c0_75 = arith.constant 0 : index
    %77 = vector.load %arg8[%c0_73, %c0_74, %c0_75] : memref<4x1x4xf32, #tpu.memory_space<vmem>>, vector<1x1x4xf32>
    %78 = vector.shape_cast %77 : vector<1x1x4xf32> to vector<1x4xf32>
    %cst_76 = arith.constant dense<0.000000e+00> : vector<1x64xf32>
    %79 = tpu.matmul %78, %75, %cst_76 {dimension_numbers = #tpu.dot_dimension_numbers<[1], [0], [0], [1], [0, 0, 1, 1], [], []>} : vector<1x4xf32>, vector<4x64xf32>, vector<1x64xf32> -> vector<1x64xf32>
    %c0_77 = arith.constant 0 : index
    %c0_78 = arith.constant 0 : index
    %c0_79 = arith.constant 0 : index
    %80 = vector.load %arg9[%c0_77, %c0_78, %c0_79] : memref<4x64x128xf32, #tpu.memory_space<vmem>>, vector<1x64x128xf32>
    %81 = vector.shape_cast %80 : vector<1x64x128xf32> to vector<64x128xf32>
    %cst_80 = arith.constant dense<0.000000e+00> : vector<1x128xf32>
    %82 = tpu.matmul %79, %81, %cst_80 {dimension_numbers = #tpu.dot_dimension_numbers<[1], [0], [0], [1], [0, 0, 1, 1], [], []>} : vector<1x64xf32>, vector<64x128xf32>, vector<1x128xf32> -> vector<1x128xf32>
    %83 = arith.addf %76, %82 : vector<1x128xf32>
    %c1_81 = arith.constant 1 : index
    %c0_82 = arith.constant 0 : index
    %c0_83 = arith.constant 0 : index
    %84 = vector.load %arg8[%c1_81, %c0_82, %c0_83] : memref<4x1x4xf32, #tpu.memory_space<vmem>>, vector<1x1x4xf32>
    %85 = vector.shape_cast %84 : vector<1x1x4xf32> to vector<1x4xf32>
    %cst_84 = arith.constant dense<0.000000e+00> : vector<1x64xf32>
    %86 = tpu.matmul %85, %75, %cst_84 {dimension_numbers = #tpu.dot_dimension_numbers<[1], [0], [0], [1], [0, 0, 1, 1], [], []>} : vector<1x4xf32>, vector<4x64xf32>, vector<1x64xf32> -> vector<1x64xf32>
    %c1_85 = arith.constant 1 : index
    %c0_86 = arith.constant 0 : index
    %c0_87 = arith.constant 0 : index
    %87 = vector.load %arg9[%c1_85, %c0_86, %c0_87] : memref<4x64x128xf32, #tpu.memory_space<vmem>>, vector<1x64x128xf32>
    %88 = vector.shape_cast %87 : vector<1x64x128xf32> to vector<64x128xf32>
    %cst_88 = arith.constant dense<0.000000e+00> : vector<1x128xf32>
    %89 = tpu.matmul %86, %88, %cst_88 {dimension_numbers = #tpu.dot_dimension_numbers<[1], [0], [0], [1], [0, 0, 1, 1], [], []>} : vector<1x64xf32>, vector<64x128xf32>, vector<1x128xf32> -> vector<1x128xf32>
    %90 = arith.addf %83, %89 : vector<1x128xf32>
    %c2_89 = arith.constant 2 : index
    %c0_90 = arith.constant 0 : index
    %c0_91 = arith.constant 0 : index
    %91 = vector.load %arg8[%c2_89, %c0_90, %c0_91] : memref<4x1x4xf32, #tpu.memory_space<vmem>>, vector<1x1x4xf32>
    %92 = vector.shape_cast %91 : vector<1x1x4xf32> to vector<1x4xf32>
    %cst_92 = arith.constant dense<0.000000e+00> : vector<1x64xf32>
    %93 = tpu.matmul %92, %75, %cst_92 {dimension_numbers = #tpu.dot_dimension_numbers<[1], [0], [0], [1], [0, 0, 1, 1], [], []>} : vector<1x4xf32>, vector<4x64xf32>, vector<1x64xf32> -> vector<1x64xf32>
    %c2_93 = arith.constant 2 : index
    %c0_94 = arith.constant 0 : index
    %c0_95 = arith.constant 0 : index
    %94 = vector.load %arg9[%c2_93, %c0_94, %c0_95] : memref<4x64x128xf32, #tpu.memory_space<vmem>>, vector<1x64x128xf32>
    %95 = vector.shape_cast %94 : vector<1x64x128xf32> to vector<64x128xf32>
    %cst_96 = arith.constant dense<0.000000e+00> : vector<1x128xf32>
    %96 = tpu.matmul %93, %95, %cst_96 {dimension_numbers = #tpu.dot_dimension_numbers<[1], [0], [0], [1], [0, 0, 1, 1], [], []>} : vector<1x64xf32>, vector<64x128xf32>, vector<1x128xf32> -> vector<1x128xf32>
    %97 = arith.addf %90, %96 : vector<1x128xf32>
    %c3_97 = arith.constant 3 : index
    %c0_98 = arith.constant 0 : index
    %c0_99 = arith.constant 0 : index
    %98 = vector.load %arg8[%c3_97, %c0_98, %c0_99] : memref<4x1x4xf32, #tpu.memory_space<vmem>>, vector<1x1x4xf32>
    %99 = vector.shape_cast %98 : vector<1x1x4xf32> to vector<1x4xf32>
    %cst_100 = arith.constant dense<0.000000e+00> : vector<1x64xf32>
    %100 = tpu.matmul %99, %75, %cst_100 {dimension_numbers = #tpu.dot_dimension_numbers<[1], [0], [0], [1], [0, 0, 1, 1], [], []>} : vector<1x4xf32>, vector<4x64xf32>, vector<1x64xf32> -> vector<1x64xf32>
    %c3_101 = arith.constant 3 : index
    %c0_102 = arith.constant 0 : index
    %c0_103 = arith.constant 0 : index
    %101 = vector.load %arg9[%c3_101, %c0_102, %c0_103] : memref<4x64x128xf32, #tpu.memory_space<vmem>>, vector<1x64x128xf32>
    %102 = vector.shape_cast %101 : vector<1x64x128xf32> to vector<64x128xf32>
    %cst_104 = arith.constant dense<0.000000e+00> : vector<1x128xf32>
    %103 = tpu.matmul %100, %102, %cst_104 {dimension_numbers = #tpu.dot_dimension_numbers<[1], [0], [0], [1], [0, 0, 1, 1], [], []>} : vector<1x64xf32>, vector<64x128xf32>, vector<1x128xf32> -> vector<1x128xf32>
    %104 = arith.addf %97, %103 : vector<1x128xf32>
    %c0_105 = arith.constant 0 : index
    %c0_106 = arith.constant 0 : index
    %105 = vector.load %arg10[%c0_105, %c0_106] : memref<1x128xf32, #tpu.memory_space<vmem>>, vector<1x128xf32>
    %106 = arith.addf %104, %105 : vector<1x128xf32>
    %cst_107 = arith.constant 0.000000e+00 : f32
    %107 = vector.broadcast %cst_107 : f32 to vector<1x128xf32>
    %108 = arith.subf %107, %106 : vector<1x128xf32>
    %109 = math.exp %108 : vector<1x128xf32>
    %cst_108 = arith.constant 1.000000e+00 : f32
    %110 = vector.broadcast %cst_108 : f32 to vector<1x128xf32>
    %111 = arith.addf %110, %109 : vector<1x128xf32>
    %cst_109 = arith.constant 1.000000e+00 : f32
    %112 = vector.broadcast %cst_109 : f32 to vector<1x128xf32>
    %113 = arith.divf %112, %111 : vector<1x128xf32>
    %114 = vector.shape_cast %113 : vector<1x128xf32> to vector<1x1x128xf32>
    %c0_110 = arith.constant 0 : index
    %c0_111 = arith.constant 0 : index
    %c0_112 = arith.constant 0 : index
    %115 = vector.load %arg11[%c0_110, %c0_111, %c0_112] : memref<1x1x128xf32, #tpu.memory_space<vmem>>, vector<1x1x128xf32>
    tpu.vector_store %arg11[%c0_110, %c0_111, %c0_112], %114 {strides = array<i32>} : memref<1x1x128xf32, #tpu.memory_space<vmem>>, vector<1x1x128xf32>,
    return
  }
  func.func @transform_0(%arg0: i32) -> (i32, i32, i32) {
    %c0_i32 = arith.constant 0 : i32
    %c0_i32_0 = arith.constant 0 : i32
    %c0_i32_1 = arith.constant 0 : i32
    return %arg0, %c0_i32, %c0_i32_0 : i32, i32, i32
  }
  func.func @transform_1(%arg0: i32) -> (i32, i32, i32) {
    %c0_i32 = arith.constant 0 : i32
    %c0_i32_0 = arith.constant 0 : i32
    %c0_i32_1 = arith.constant 0 : i32
    %c0_i32_2 = arith.constant 0 : i32
    return %c0_i32, %c0_i32_0, %c0_i32_1 : i32, i32, i32
  }
  func.func @transform_2(%arg0: i32) -> (i32, i32, i32) {
    %c0_i32 = arith.constant 0 : i32
    %c0_i32_0 = arith.constant 0 : i32
    %c0_i32_1 = arith.constant 0 : i32
    %c0_i32_2 = arith.constant 0 : i32
    return %c0_i32, %c0_i32_0, %c0_i32_1 : i32, i32, i32
  }
  func.func @transform_3(%arg0: i32) -> (i32, i32) {
    %c0_i32 = arith.constant 0 : i32
    %c0_i32_0 = arith.constant 0 : i32
    %c0_i32_1 = arith.constant 0 : i32
    return %c0_i32, %c0_i32_0 : i32, i32
  }
  func.func @transform_4(%arg0: i32) -> (i32, i32, i32) {
    %c0_i32 = arith.constant 0 : i32
    %c0_i32_0 = arith.constant 0 : i32
    %c0_i32_1 = arith.constant 0 : i32
    %c0_i32_2 = arith.constant 0 : i32
    return %c0_i32, %c0_i32_0, %c0_i32_1 : i32, i32, i32
  }
  func.func @transform_5(%arg0: i32) -> (i32, i32, i32) {
    %c0_i32 = arith.constant 0 : i32
    %c0_i32_0 = arith.constant 0 : i32
    %c0_i32_1 = arith.constant 0 : i32
    %c0_i32_2 = arith.constant 0 : i32
    return %c0_i32, %c0_i32_0, %c0_i32_1 : i32, i32, i32
  }
  func.func @transform_6(%arg0: i32) -> (i32, i32) {
    %c0_i32 = arith.constant 0 : i32
    %c0_i32_0 = arith.constant 0 : i32
    %c0_i32_1 = arith.constant 0 : i32
    return %c0_i32, %c0_i32_0 : i32, i32
  }
  func.func @transform_7(%arg0: i32) -> (i32, i32, i32) {
    %c0_i32 = arith.constant 0 : i32
    %c0_i32_0 = arith.constant 0 : i32
    %c0_i32_1 = arith.constant 0 : i32
    %c0_i32_2 = arith.constant 0 : i32
    return %c0_i32, %c0_i32_0, %c0_i32_1 : i32, i32, i32
  }
  func.func @transform_8(%arg0: i32) -> (i32, i32, i32) {
    %c0_i32 = arith.constant 0 : i32
    %c0_i32_0 = arith.constant 0 : i32
    %c0_i32_1 = arith.constant 0 : i32
    %c0_i32_2 = arith.constant 0 : i32
    return %c0_i32, %c0_i32_0, %c0_i32_1 : i32, i32, i32
  }
  func.func @transform_9(%arg0: i32) -> (i32, i32) {
    %c0_i32 = arith.constant 0 : i32
    %c0_i32_0 = arith.constant 0 : i32
    %c0_i32_1 = arith.constant 0 : i32
    return %c0_i32, %c0_i32_0 : i32, i32
  }
  func.func @transform_10(%arg0: i32) -> (i32, i32, i32) {
    %c0_i32 = arith.constant 0 : i32
    %c0_i32_0 = arith.constant 0 : i32
    %c0_i32_1 = arith.constant 0 : i32
    return %arg0, %c0_i32, %c0_i32_0 : i32, i32, i32
  }
}

</mosaic_0001>

<llo_original>
// kernel: _lambda_.1
$region0: #{_lambda_.1}
  #allocation0 [shape = 'u32[]', space=smem, size = 0x4, offset = 0x4, fixed_abs, tag = 'smem constant byte address 0x4 - core index']
  #allocation1 [shape = 'u32[144,128]{1,0:T(1,128)}', space=vmem, size = 0x12000, scoped, tag = 'internal scratch']
  %s0 = inlined_call_operand.vmem [shape: f32[2,16,64], index: 0, kind: input, shape index: {}]
  %s1 = inlined_call_operand.vmem [shape: f32[4,8,16], index: 1, kind: input, shape index: {}]
  %s2 = inlined_call_operand.hbm [shape: f32[4,64,64], index: 2, kind: input, shape index: {}]
  %s3 = inlined_call_operand.vmem [shape: f32[1,64], index: 3, kind: input, shape index: {}]
  %s4 = inlined_call_operand.vmem [shape: f32[4,4,8], index: 4, kind: input, shape index: {}]
  %s5 = inlined_call_operand.hbm [shape: f32[4,64,64], index: 5, kind: input, shape index: {}]
  %s6 = inlined_call_operand.vmem [shape: f32[1,64], index: 6, kind: input, shape index: {}]
  %s7 = inlined_call_operand.vmem [shape: f32[4,1,4], index: 7, kind: input, shape index: {}]
  %s8 = inlined_call_operand.vmem [shape: f32[4,64,128], index: 8, kind: input, shape index: {}]
  %s9 = inlined_call_operand.vmem [shape: f32[1,128], index: 9, kind: input, shape index: {}]
  %s10 = inlined_call_operand.vmem [shape: f32[2,1,128], index: 10, kind: output, shape index: {}]
  %s11 = sld [smem:[#allocation0]]
  $region81: #{_lambda_.1} parent=0
    _
  %s13 = ssub.s32 1, %s11
  %s14 = scalar_select 0, %s13, %s11
  $region1: #{_lambda_.1} parent=0
    #allocation2 [shape = 'u8[131072]{0}', space=vmem, size = 0x20000, scoped, tag = 'input window, operand 2, single buffered']
    #allocation3 [shape = 's32[2]{0}', space=sflag, size = 0x8, scoped, tag = 'scoped memory for _lambda_.1']
    #allocation4 [shape = 'u8[131072]{0}', space=vmem, size = 0x20000, scoped, tag = 'input window, operand 5, single buffered']
    #allocation5 [shape = 's32[1]{0}', space=sflag, size = 0x4, scoped, tag = 'scoped memory for _lambda_.1']
    %15 = vsyncpa [#allocation3], 0
    %16 = vsyncpa [#allocation5], 0
    loop: start=0, step=1, limit=4
    $region2: #{_lambda_.1} parent=1 // loop_pre_header
      _
    $region3: #{_lambda_.1} parent=1 // loop_header
      %s18 = sphi 0, %s22
      %p19 = scmp.ge.s32.totalorder %s18, 4
      %s28 = sphi 0, %s30
      %s31 = sphi 0, %s28
      %s32 = sphi 0, %s31
      %s48 = sphi 0, %s32
      %s52 = sphi 0, %s52
      %s54 = sphi 0, %s52
      %s55 = sphi 0, %s54
      %s69 = sphi 0, %s55
      %s73 = sphi 0, %s73
      %s75 = sphi 0, %s73
      %s76 = sphi 0, %s75
      %s90 = sphi 0, %s76
      %s94 = sphi 0, %s94
      %s96 = sphi 0, %s94
      %s97 = sphi 0, %s96
      %s111 = sphi 0, %s97
      %s115 = sphi 0, %s115
      %s117 = sphi 0, %s115
      %s118 = sphi 0, %s117
      %s132 = sphi 0, %s118
      %s136 = sphi 0, %s136
      %s138 = sphi 0, %s136
      %s139 = sphi 0, %s138
      %s153 = sphi 0, %s139
      %s157 = sphi 0, %s157
      %s159 = sphi 0, %s157
      %s160 = sphi 0, %s159
      %s174 = sphi 0, %s160
      %s178 = sphi 0, %s178
      %s180 = sphi 0, %s178
      %s181 = sphi 0, %s180
      %s195 = sphi 0, %s181
      %s199 = sphi 0, %s199
      %s201 = sphi 0, %s199
      %s202 = sphi 0, %s201
      %s216 = sphi 0, %s202
      %s220 = sphi 0, %s220
      %s222 = sphi 0, %s220
      %s223 = sphi 0, %s222
      %s237 = sphi 0, %s223
      %s243 = sphi 0, %s245
      %s246 = sphi 0, %s243
      %s247 = sphi 0, %s246
      %s263 = sphi 0, %s247
    $region4: #{_lambda_.1} parent=1 // loop_header_branch
      %21 = sbr.rel (%p19) target = $region8
    $region5: #{_lambda_.1} parent=1 // loop_body
      %s23 = ssub.s32 %s18, 1
      %s24 = ssub.s32 %s18, 2
      %s25 = sadd.s32 %s18, 1
      %s26 = ssub.s32 %s18, %s25
      %p27 = scmp.eq.s32.totalorder %s26, 0
      %s29 = sadd.s32 %s28, 1
      %s30 = scalar_select %p27, %s28, %s29
      %p33 = pneg %p27
      %p34 = scmp.eq.s32.totalorder %s18, 1
      %p35 = por %p33, %p34
      %p36 = scmp.ne.s32.totalorder %s28, %s31
      %p37 = scmp.eq.s32.totalorder %s18, 0
      %p38 = por %p36, %p37
      %p39 = scmp.ne.s32.totalorder %s28, %s31
      %p40 = scmp.eq.s32.totalorder %s23, 1
      %p41 = por %p39, %p40
      %p42 = scmp.ne.s32.totalorder %s31, %s32
      %p43 = scmp.eq.s32.totalorder %s23, 0
      %p44 = por %p42, %p43
      %p45 = scmp.ne.s32.totalorder %s31, %s32
      %p46 = scmp.eq.s32.totalorder %s24, 1
      %p47 = por %p45, %p46
      %p49 = scmp.ne.s32.totalorder %s32, %s48
      %p50 = scmp.eq.s32.totalorder %s24, 0
      %p51 = por %p49, %p50
      %s53 = sadd.s32 %s52, 1
      %p56 = scmp.eq.s32.totalorder %s18, 1
      %p57 = scmp.ne.s32.totalorder %s52, %s54
      %p58 = scmp.eq.s32.totalorder %s18, 0
      %p59 = por %p57, %p58
      %p60 = scmp.ne.s32.totalorder %s52, %s54
      %p61 = scmp.eq.s32.totalorder %s23, 1
      %p62 = por %p60, %p61
      %p63 = scmp.ne.s32.totalorder %s54, %s55
      %p64 = scmp.eq.s32.totalorder %s23, 0
      %p65 = por %p63, %p64
      %p66 = scmp.ne.s32.totalorder %s54, %s55
      %p67 = scmp.eq.s32.totalorder %s24, 1
      %p68 = por %p66, %p67
      %p70 = scmp.ne.s32.totalorder %s55, %s69
      %p71 = scmp.eq.s32.totalorder %s24, 0
      %p72 = por %p70, %p71
      %s74 = sadd.s32 %s73, 1
      %p77 = scmp.eq.s32.totalorder %s18, 1
      %p78 = scmp.ne.s32.totalorder %s73, %s75
      %p79 = scmp.eq.s32.totalorder %s18, 0
      %p80 = por %p78, %p79
      %p81 = scmp.ne.s32.totalorder %s73, %s75
      %p82 = scmp.eq.s32.totalorder %s23, 1
      %p83 = por %p81, %p82
      %p84 = scmp.ne.s32.totalorder %s75, %s76
      %p85 = scmp.eq.s32.totalorder %s23, 0
      %p86 = por %p84, %p85
      %p87 = scmp.ne.s32.totalorder %s75, %s76
      %p88 = scmp.eq.s32.totalorder %s24, 1
      %p89 = por %p87, %p88
      %p91 = scmp.ne.s32.totalorder %s76, %s90
      %p92 = scmp.eq.s32.totalorder %s24, 0
      %p93 = por %p91, %p92
      %s95 = sadd.s32 %s94, 1
      %p98 = scmp.eq.s32.totalorder %s18, 1
      %p99 = scmp.ne.s32.totalorder %s94, %s96
      %p100 = scmp.eq.s32.totalorder %s18, 0
      %p101 = por %p99, %p100
      %p102 = scmp.ne.s32.totalorder %s94, %s96
      %p103 = scmp.eq.s32.totalorder %s23, 1
      %p104 = por %p102, %p103
      %p105 = scmp.ne.s32.totalorder %s96, %s97
      %p106 = scmp.eq.s32.totalorder %s23, 0
      %p107 = por %p105, %p106
      %p108 = scmp.ne.s32.totalorder %s96, %s97
      %p109 = scmp.eq.s32.totalorder %s24, 1
      %p110 = por %p108, %p109
      %p112 = scmp.ne.s32.totalorder %s97, %s111
      %p113 = scmp.eq.s32.totalorder %s24, 0
      %p114 = por %p112, %p113
      %s116 = sadd.s32 %s115, 1
      %p119 = scmp.eq.s32.totalorder %s18, 1
      %p120 = scmp.ne.s32.totalorder %s115, %s117
      %p121 = scmp.eq.s32.totalorder %s18, 0
      %p122 = por %p120, %p121
      %p123 = scmp.ne.s32.totalorder %s115, %s117
      %p124 = scmp.eq.s32.totalorder %s23, 1
      %p125 = por %p123, %p124
      %p126 = scmp.ne.s32.totalorder %s117, %s118
      %p127 = scmp.eq.s32.totalorder %s23, 0
      %p128 = por %p126, %p127
      %p129 = scmp.ne.s32.totalorder %s117, %s118
      %p130 = scmp.eq.s32.totalorder %s24, 1
      %p131 = por %p129, %p130
      %p133 = scmp.ne.s32.totalorder %s118, %s132
      %p134 = scmp.eq.s32.totalorder %s24, 0
      %p135 = por %p133, %p134
      %s137 = sadd.s32 %s136, 1
      %p140 = scmp.eq.s32.totalorder %s18, 1
      %p141 = scmp.ne.s32.totalorder %s136, %s138
      %p142 = scmp.eq.s32.totalorder %s18, 0
      %p143 = por %p141, %p142
      %p144 = scmp.ne.s32.totalorder %s136, %s138
      %p145 = scmp.eq.s32.totalorder %s23, 1
      %p146 = por %p144, %p145
      %p147 = scmp.ne.s32.totalorder %s138, %s139
      %p148 = scmp.eq.s32.totalorder %s23, 0
      %p149 = por %p147, %p148
      %p150 = scmp.ne.s32.totalorder %s138, %s139
      %p151 = scmp.eq.s32.totalorder %s24, 1
      %p152 = por %p150, %p151
      %p154 = scmp.ne.s32.totalorder %s139, %s153
      %p155 = scmp.eq.s32.totalorder %s24, 0
      %p156 = por %p154, %p155
      %s158 = sadd.s32 %s157, 1
      %p161 = scmp.eq.s32.totalorder %s18, 1
      %p162 = scmp.ne.s32.totalorder %s157, %s159
      %p163 = scmp.eq.s32.totalorder %s18, 0
      %p164 = por %p162, %p163
      %p165 = scmp.ne.s32.totalorder %s157, %s159
      %p166 = scmp.eq.s32.totalorder %s23, 1
      %p167 = por %p165, %p166
      %p168 = scmp.ne.s32.totalorder %s159, %s160
      %p169 = scmp.eq.s32.totalorder %s23, 0
      %p170 = por %p168, %p169
      %p171 = scmp.ne.s32.totalorder %s159, %s160
      %p172 = scmp.eq.s32.totalorder %s24, 1
      %p173 = por %p171, %p172
      %p175 = scmp.ne.s32.totalorder %s160, %s174
      %p176 = scmp.eq.s32.totalorder %s24, 0
      %p177 = por %p175, %p176
      %s179 = sadd.s32 %s178, 1
      %p182 = scmp.eq.s32.totalorder %s18, 1
      %p183 = scmp.ne.s32.totalorder %s178, %s180
      %p184 = scmp.eq.s32.totalorder %s18, 0
      %p185 = por %p183, %p184
      %p186 = scmp.ne.s32.totalorder %s178, %s180
      %p187 = scmp.eq.s32.totalorder %s23, 1
      %p188 = por %p186, %p187
      %p189 = scmp.ne.s32.totalorder %s180, %s181
      %p190 = scmp.eq.s32.totalorder %s23, 0
      %p191 = por %p189, %p190
      %p192 = scmp.ne.s32.totalorder %s180, %s181
      %p193 = scmp.eq.s32.totalorder %s24, 1
      %p194 = por %p192, %p193
      %p196 = scmp.ne.s32.totalorder %s181, %s195
      %p197 = scmp.eq.s32.totalorder %s24, 0
      %p198 = por %p196, %p197
      %s200 = sadd.s32 %s199, 1
      %p203 = scmp.eq.s32.totalorder %s18, 1
      %p204 = scmp.ne.s32.totalorder %s199, %s201
      %p205 = scmp.eq.s32.totalorder %s18, 0
      %p206 = por %p204, %p205
      %p207 = scmp.ne.s32.totalorder %s199, %s201
      %p208 = scmp.eq.s32.totalorder %s23, 1
      %p209 = por %p207, %p208
      %p210 = scmp.ne.s32.totalorder %s201, %s202
      %p211 = scmp.eq.s32.totalorder %s23, 0
      %p212 = por %p210, %p211
      %p213 = scmp.ne.s32.totalorder %s201, %s202
      %p214 = scmp.eq.s32.totalorder %s24, 1
      %p215 = por %p213, %p214
      %p217 = scmp.ne.s32.totalorder %s202, %s216
      %p218 = scmp.eq.s32.totalorder %s24, 0
      %p219 = por %p217, %p218
      %s221 = sadd.s32 %s220, 1
      %p224 = scmp.eq.s32.totalorder %s18, 1
      %p225 = scmp.ne.s32.totalorder %s220, %s222
      %p226 = scmp.eq.s32.totalorder %s18, 0
      %p227 = por %p225, %p226
      %p228 = scmp.ne.s32.totalorder %s220, %s222
      %p229 = scmp.eq.s32.totalorder %s23, 1
      %p230 = por %p228, %p229
      %p231 = scmp.ne.s32.totalorder %s222, %s223
      %p232 = scmp.eq.s32.totalorder %s23, 0
      %p233 = por %p231, %p232
      %p234 = scmp.ne.s32.totalorder %s222, %s223
      %p235 = scmp.eq.s32.totalorder %s24, 1
      %p236 = por %p234, %p235
      %p238 = scmp.ne.s32.totalorder %s223, %s237
      %p239 = scmp.eq.s32.totalorder %s24, 0
      %p240 = por %p238, %p239
      %s241 = ssub.s32 %s18, %s25
      %p242 = scmp.eq.s32.totalorder %s241, 0
      %s244 = sadd.s32 %s243, 1
      %s245 = scalar_select %p242, %s243, %s244
      %p248 = pneg %p242
      %p249 = scmp.eq.s32.totalorder %s18, 1
      %p250 = por %p248, %p249
      %p251 = scmp.ne.s32.totalorder %s243, %s246
      %p252 = scmp.eq.s32.totalorder %s18, 0
      %p253 = por %p251, %p252
      %p254 = scmp.ne.s32.totalorder %s243, %s246
      %p255 = scmp.eq.s32.totalorder %s23, 1
      %p256 = por %p254, %p255
      %p257 = scmp.ne.s32.totalorder %s246, %s247
      %p258 = scmp.eq.s32.totalorder %s23, 0
      %p259 = por %p257, %p258
      %p260 = scmp.ne.s32.totalorder %s246, %s247
      %p261 = scmp.eq.s32.totalorder %s24, 1
      %p262 = por %p260, %p261
      %p264 = scmp.ne.s32.totalorder %s247, %s263
      %p265 = scmp.eq.s32.totalorder %s24, 0
      %p266 = por %p264, %p265
      %p267 = scmp.le.s32.totalorder 1, %s18
      %p268 = scmp.lt.s32.totalorder %s18, 3
      %p269 = pnand %p267, %p268
      %p270 = pneg %p269
      // Predicated region
      $region9: #{_lambda_.1} parent=5 // pred_check
        _
      $region10: #{_lambda_.1} parent=5 // pred_check_branch
        %272 = sbr.rel (%p269) target = $region12
      $region11: #{_lambda_.1} parent=5 // pred_region
        %s273 = ssub.s32 %s18, 1
        // Predicated region
        $region13: #{_lambda_.1} parent=11 // pred_check
          %p274 = pneg %p65
        $region14: #{_lambda_.1} parent=11 // pred_check_branch
          %276 = sbr.rel (%p274) target = $region16
        $region15: #{_lambda_.1} parent=11 // pred_region
          _
        $region16: #{_lambda_.1} parent=11 // pred_fallthru
          _
        // Predicated region
        $region17: #{_lambda_.1} parent=11 // pred_check
          %p277 = pneg %p86
        $region18: #{_lambda_.1} parent=11 // pred_check_branch
          %279 = sbr.rel (%p277) target = $region20
        $region19: #{_lambda_.1} parent=11 // pred_region
          %s281 = ssub.s32 4096, 4096
          %282 = vsyncadd [#allocation3], %s281
          %s283 = sshll.u32 [#allocation2], 4
          %s284 = int_to_ptr.vmem [resolvable:$true] %s283
          %289 = dma.hbm_to_vmem [thread:$0]  %s2, 4096, %s284, [#allocation3], 128, 128, 8
        $region20: #{_lambda_.1} parent=11 // pred_fallthru
          _
        // Predicated region
        $region21: #{_lambda_.1} parent=11 // pred_check
          %p290 = pneg %p107
        $region22: #{_lambda_.1} parent=11 // pred_check_branch
          %292 = sbr.rel (%p290) target = $region24
        $region23: #{_lambda_.1} parent=11 // pred_region
          _
        $region24: #{_lambda_.1} parent=11 // pred_fallthru
          _
        // Predicated region
        $region25: #{_lambda_.1} parent=11 // pred_check
          %p293 = pneg %p128
        $region26: #{_lambda_.1} parent=11 // pred_check_branch
          %295 = sbr.rel (%p293) target = $region28
        $region27: #{_lambda_.1} parent=11 // pred_region
          _
        $region28: #{_lambda_.1} parent=11 // pred_fallthru
          _
        // Predicated region
        $region29: #{_lambda_.1} parent=11 // pred_check
          %p296 = pneg %p149
        $region30: #{_lambda_.1} parent=11 // pred_check_branch
          %298 = sbr.rel (%p296) target = $region32
        $region31: #{_lambda_.1} parent=11 // pred_region
          %s300 = ssub.s32 4096, 4096
          %301 = vsyncadd [#allocation5], %s300
          %s302 = sshll.u32 [#allocation4], 4
          %s303 = int_to_ptr.vmem [resolvable:$true] %s302
          %308 = dma.hbm_to_vmem [thread:$0]  %s5, 4096, %s303, [#allocation5], 128, 128, 8
        $region32: #{_lambda_.1} parent=11 // pred_fallthru
          _
        // Predicated region
        $region33: #{_lambda_.1} parent=11 // pred_check
          %p309 = pneg %p170
        $region34: #{_lambda_.1} parent=11 // pred_check_branch
          %311 = sbr.rel (%p309) target = $region36
        $region35: #{_lambda_.1} parent=11 // pred_region
          _
        $region36: #{_lambda_.1} parent=11 // pred_fallthru
          _
        // Predicated region
        $region37: #{_lambda_.1} parent=11 // pred_check
          %p312 = pneg %p191
        $region38: #{_lambda_.1} parent=11 // pred_check_branch
          %314 = sbr.rel (%p312) target = $region40
        $region39: #{_lambda_.1} parent=11 // pred_region
          _
        $region40: #{_lambda_.1} parent=11 // pred_fallthru
          _
        // Predicated region
        $region41: #{_lambda_.1} parent=11 // pred_check
          %p315 = pneg %p212
        $region42: #{_lambda_.1} parent=11 // pred_check_branch
          %317 = sbr.rel (%p315) target = $region44
        $region43: #{_lambda_.1} parent=11 // pred_region
          _
        $region44: #{_lambda_.1} parent=11 // pred_fallthru
          _
        // Predicated region
        $region45: #{_lambda_.1} parent=11 // pred_check
          %p318 = pneg %p233
        $region46: #{_lambda_.1} parent=11 // pred_check_branch
          %320 = sbr.rel (%p318) target = $region48
        $region47: #{_lambda_.1} parent=11 // pred_region
          _
        $region48: #{_lambda_.1} parent=11 // pred_fallthru
          _
      $region12: #{_lambda_.1} parent=5 // pred_fallthru
        _
      %p321 = scmp.lt.s32.totalorder %s18, 2
      // Predicated region
      $region49: #{_lambda_.1} parent=5 // pred_check
        %p322 = pneg %p321
      $region50: #{_lambda_.1} parent=5 // pred_check_branch
        %324 = sbr.rel (%p322) target = $region52
      $region51: #{_lambda_.1} parent=5 // pred_region
        // Predicated region
        $region53: #{_lambda_.1} parent=51 // pred_check
          %p325 = pneg %p38
        $region54: #{_lambda_.1} parent=51 // pred_check_branch
          %327 = sbr.rel (%p325) target = $region56
        $region55: #{_lambda_.1} parent=51 // pred_region
          %p328 = scmp.lt.s32.totalorder %s18, 1
          %s329 = scalar_select %p328, %s18, 1
          %s330 = smul.addr %s329, 2
          %s331 = smul.addr %s330, 8
          %s332 = scalar_lea.vmem %s0, %s331
        $region56: #{_lambda_.1} parent=51 // pred_fallthru
          _
      $region52: #{_lambda_.1} parent=5 // pred_fallthru
        _
      %p333 = scmp.le.s32.totalorder 1, %s18
      %p334 = scmp.lt.s32.totalorder %s18, 3
      %p335 = pnand %p333, %p334
      %p336 = pneg %p335
      // Predicated region
      $region57: #{_lambda_.1} parent=5 // pred_check
        _
      $region58: #{_lambda_.1} parent=5 // pred_check_branch
        %338 = sbr.rel (%p335) target = $region60
      $region59: #{_lambda_.1} parent=5 // pred_region
        %s339 = ssub.s32 %s18, 1
        // Predicated region
        $region61: #{_lambda_.1} parent=59 // pred_check
          %p340 = pneg %p86
        $region62: #{_lambda_.1} parent=59 // pred_check_branch
          %342 = sbr.rel (%p340) target = $region64
        $region63: #{_lambda_.1} parent=59 // pred_region
          %343 = dma.done [#allocation3], 4096
        $region64: #{_lambda_.1} parent=59 // pred_fallthru
          _
        // Predicated region
        $region65: #{_lambda_.1} parent=59 // pred_check
          %p344 = pneg %p149
        $region66: #{_lambda_.1} parent=59 // pred_check_branch
          %346 = sbr.rel (%p344) target = $region68
        $region67: #{_lambda_.1} parent=59 // pred_region
          %347 = dma.done [#allocation5], 4096
        $region68: #{_lambda_.1} parent=59 // pred_fallthru
          _
        %p348 = scmp.lt.s32.totalorder %s23, 1
        %s349 = scalar_select %p348, %s23, 1
        %s350 = smul.addr %s349, 2
        %s351 = smul.addr %s350, 8
        %s352 = scalar_lea.vmem %s0, %s351
        %p353 = pneg %p44
        %p354 = pneg %p41
        %p355 = pneg %p65
        %p356 = pneg %p62
        %p357 = pneg %p86
        %p358 = pneg %p83
        %p359 = pneg %p107
        %p360 = pneg %p104
        %p361 = pneg %p128
        %p362 = pneg %p125
        %p363 = pneg %p149
        %p364 = pneg %p146
        %p365 = pneg %p170
        %p366 = pneg %p167
        %p367 = pneg %p191
        %p368 = pneg %p188
        %p369 = pneg %p212
        %p370 = pneg %p209
        %p371 = pneg %p233
        %p372 = pneg %p230
        %p373 = pneg %p259
        %p374 = pneg %p256
        %p375 = scmp.lt.s32.totalorder %s23, 1
        %s376 = scalar_select %p375, %s23, 1
        %s377 = scalar_lea.vmem %s10, %s376
        %p378 = scmp.lt.s32.totalorder %s23, 1
        %s379 = scalar_select %p378, %s23, 1
        %s380 = smul.addr %s379, 2
        %s381 = smul.addr %s380, 8
        %s382 = scalar_lea.vmem %s0, %s381
        %p383 = scmp.lt.s32.totalorder %s23, 1
        %s384 = scalar_select %p383, %s23, 1
        %s385 = scalar_lea.vmem %s10, %s384
        %v386 = vld [vmem:[%s382] sm:$0xff]
        %v387 = vld [vmem:[%s382 + $0x8] sm:$0xff]
        %v388 = vld [vmem:[%s1] sm:$0xff]
        %vm389 = vcmask 130048
        %v391 = vsel %vm389, %v388, 0
        %393 = vmatprep.subr.mxu0 0.0
        %394 = vmatpush1.msra.mxu0 %v386
        %395 = vmatprep.subr.mxu0 0.0
        %396 = vmatpush1.msra.mxu0 %v387
        %397 = vmatprep.subr.mxu0 0.0
        %398 = vmatpush1.msra.mxu0 0.0
        %399 = vmatprep.subr.mxu0 0.0
        %400 = vmatpush1.msra.mxu0 0.0
        %401 = vmatprep.subr.mxu0 0.0
        %402 = vmatpush1.msra.mxu0 0.0
        %403 = vmatprep.subr.mxu0 0.0
        %404 = vmatpush1.msra.mxu0 0.0
        %405 = vmatprep.subr.mxu0 0.0
        %406 = vmatpush1.msra.mxu0 0.0
        %407 = vmatprep.subr.mxu0 0.0
        %408 = vmatpush1.msra.mxu0 0.0
        %409 = vmatprep.subr.mxu0 0.0
        %410 = vmatpush1.msra.mxu0 0.0
        %411 = vmatprep.subr.mxu0 0.0
        %412 = vmatpush1.msra.mxu0 0.0
        %413 = vmatprep.subr.mxu0 0.0
        %414 = vmatpush1.msra.mxu0 0.0
        %415 = vmatprep.subr.mxu0 0.0
        %416 = vmatpush1.msra.mxu0 0.0
        %417 = vmatprep.subr.mxu0 0.0
        %418 = vmatpush1.msra.mxu0 0.0
        %419 = vmatprep.subr.mxu0 0.0
        %420 = vmatpush1.msra.mxu0 0.0
        %421 = vmatprep.subr.mxu0 0.0
        %422 = vmatpush1.msra.mxu0 0.0
        %423 = vmatprep.subr.mxu0 0.0
        %424 = vmatpush1.msra.mxu0 0.0
        %425 = vmatprep.subr.mxu0 0.0
        %426 = vmatpush1.msra.mxu0 0.0
        %427 = vmatprep.subr.mxu0 0.0
        %428 = vmatpush1.msra.mxu0 0.0
        %429 = vmatprep.subr.mxu0 0.0
        %430 = vmatpush1.msra.mxu0 0.0
        %431 = vmatprep.subr.mxu0 0.0
        %432 = vmatpush1.msra.mxu0 0.0
        %433 = vmatprep.subr.mxu0 0.0
        %434 = vmatpush1.msra.mxu0 0.0
        %435 = vmatprep.subr.mxu0 0.0
        %436 = vmatpush1.msra.mxu0 0.0
        %437 = vmatprep.subr.mxu0 0.0
        %438 = vmatpush1.msra.mxu0 0.0
        %439 = vmatprep.subr.mxu0 0.0
        %440 = vmatpush1.msra.mxu0 0.0
        %441 = vmatprep.subr.mxu0 0.0
        %442 = vmatpush1.msra.mxu0 0.0
        %443 = vmatprep.subr.mxu0 0.0
        %444 = vmatpush1.msra.mxu0 0.0
        %445 = vmatprep.subr.mxu0 0.0
        %446 = vmatpush1.msra.mxu0 0.0
        %447 = vmatprep.subr.mxu0 0.0
        %448 = vmatpush1.msra.mxu0 0.0
        %449 = vmatprep.subr.mxu0 0.0
        %450 = vmatpush1.msra.mxu0 0.0
        %451 = vmatprep.subr.mxu0 0.0
        %452 = vmatpush1.msra.mxu0 0.0
        %453 = vmatprep.subr.mxu0 0.0
        %454 = vmatpush1.msra.mxu0 0.0
        %455 = vmatprep.subr.mxu0 0.0
        %456 = vmatpush1.msra.mxu0 0.0
        %457 = vmatprep.mubr.f32.mxu0 0.0
        %458 = vmatmul.mubr.f32.gmra.mrb[0].mxu0 %v391
        %v459 = vpop.f32.mrb[0].mxu0
        %v460 = vadd.f32 0.0, %v459
        %v461 = vpop.f32.mrb[0].mxu0
        %462 = vdwg.mxu0
        %v463 = vld [vmem:[#allocation2] sm:$0xff]
        %v464 = vld [vmem:[#allocation2 + $0x8] sm:$0xff]
        %v465 = vld [vmem:[#allocation2 + $0x10] sm:$0xff]
        %v466 = vld [vmem:[#allocation2 + $0x18] sm:$0xff]
        %v467 = vld [vmem:[#allocation2 + $0x20] sm:$0xff]
        %v468 = vld [vmem:[#allocation2 + $0x28] sm:$0xff]
        %v469 = vld [vmem:[#allocation2 + $0x30] sm:$0xff]
        %v470 = vld [vmem:[#allocation2 + $0x38] sm:$0xff]
        %s471 = scalar_lea.vmem %s1, 8
        %v472 = vld [vmem:[%s471] sm:$0xff]
        %v474 = vsel %vm389, %v472, 0
        %476 = vmatprep.subr.mxu0 0.0
        %477 = vmatpush1.msra.mxu0 %v386
        %478 = vmatprep.subr.mxu0 0.0
        %479 = vmatpush1.msra.mxu0 %v387
        %480 = vmatprep.subr.mxu0 0.0
        %481 = vmatpush1.msra.mxu0 0.0
        %482 = vmatprep.subr.mxu0 0.0
        %483 = vmatpush1.msra.mxu0 0.0
        %484 = vmatprep.subr.mxu0 0.0
        %485 = vmatpush1.msra.mxu0 0.0
        %486 = vmatprep.subr.mxu0 0.0
        %487 = vmatpush1.msra.mxu0 0.0
        %488 = vmatprep.subr.mxu0 0.0
        %489 = vmatpush1.msra.mxu0 0.0
        %490 = vmatprep.subr.mxu0 0.0
        %491 = vmatpush1.msra.mxu0 0.0
        %492 = vmatprep.subr.mxu0 0.0
        %493 = vmatpush1.msra.mxu0 0.0
        %494 = vmatprep.subr.mxu0 0.0
        %495 = vmatpush1.msra.mxu0 0.0
        %496 = vmatprep.subr.mxu0 0.0
        %497 = vmatpush1.msra.mxu0 0.0
        %498 = vmatprep.subr.mxu0 0.0
        %499 = vmatpush1.msra.mxu0 0.0
        %500 = vmatprep.subr.mxu0 0.0
        %501 = vmatpush1.msra.mxu0 0.0
        %502 = vmatprep.subr.mxu0 0.0
        %503 = vmatpush1.msra.mxu0 0.0
        %504 = vmatprep.subr.mxu0 0.0
        %505 = vmatpush1.msra.mxu0 0.0
        %506 = vmatprep.subr.mxu0 0.0
        %507 = vmatpush1.msra.mxu0 0.0
        %508 = vmatprep.subr.mxu0 0.0
        %509 = vmatpush1.msra.mxu0 0.0
        %510 = vmatprep.subr.mxu0 0.0
        %511 = vmatpush1.msra.mxu0 0.0
        %512 = vmatprep.subr.mxu0 0.0
        %513 = vmatpush1.msra.mxu0 0.0
        %514 = vmatprep.subr.mxu0 0.0
        %515 = vmatpush1.msra.mxu0 0.0
        %516 = vmatprep.subr.mxu0 0.0
        %517 = vmatpush1.msra.mxu0 0.0
        %518 = vmatprep.subr.mxu0 0.0
        %519 = vmatpush1.msra.mxu0 0.0
        %520 = vmatprep.subr.mxu0 0.0
        %521 = vmatpush1.msra.mxu0 0.0
        %522 = vmatprep.subr.mxu0 0.0
        %523 = vmatpush1.msra.mxu0 0.0
        %524 = vmatprep.subr.mxu0 0.0
        %525 = vmatpush1.msra.mxu0 0.0
        %526 = vmatprep.subr.mxu0 0.0
        %527 = vmatpush1.msra.mxu0 0.0
        %528 = vmatprep.subr.mxu0 0.0
        %529 = vmatpush1.msra.mxu0 0.0
        %530 = vmatprep.subr.mxu0 0.0
        %531 = vmatpush1.msra.mxu0 0.0
        %532 = vmatprep.subr.mxu0 0.0
        %533 = vmatpush1.msra.mxu0 0.0
        %534 = vmatprep.subr.mxu0 0.0
        %535 = vmatpush1.msra.mxu0 0.0
        %536 = vmatprep.subr.mxu0 0.0
        %537 = vmatpush1.msra.mxu0 0.0
        %538 = vmatprep.subr.mxu0 0.0
        %539 = vmatpush1.msra.mxu0 0.0
        %540 = vmatprep.mubr.f32.mxu0 0.0
        %541 = vmatmul.mubr.f32.gmra.mrb[0].mxu0 %v474
        %v542 = vpop.f32.mrb[0].mxu0
        %v543 = vadd.f32 0.0, %v542
        %v544 = vpop.f32.mrb[0].mxu0
        %545 = vdwg.mxu0
        %s546 = scalar_lea.vmem [#allocation2], 64
        %v547 = vld [vmem:[%s546] sm:$0xff]
        %v548 = vld [vmem:[%s546 + $0x8] sm:$0xff]
        %v549 = vld [vmem:[%s546 + $0x10] sm:$0xff]
        %v550 = vld [vmem:[%s546 + $0x18] sm:$0xff]
        %v551 = vld [vmem:[%s546 + $0x20] sm:$0xff]
        %v552 = vld [vmem:[%s546 + $0x28] sm:$0xff]
        %v553 = vld [vmem:[%s546 + $0x30] sm:$0xff]
        %v554 = vld [vmem:[%s546 + $0x38] sm:$0xff]
        %vm555 = vcmask 523264
        %v557 = vsel %vm555, %v543, 0
        %559 = vmatprep.subr.mxu0 0.0
        %560 = vmatpush1.msra.mxu0 %v547
        %561 = vmatprep.subr.mxu0 0.0
        %562 = vmatpush1.msra.mxu0 %v548
        %563 = vmatprep.subr.mxu0 0.0
        %564 = vmatpush1.msra.mxu0 %v549
        %565 = vmatprep.subr.mxu0 0.0
        %566 = vmatpush1.msra.mxu0 %v550
        %567 = vmatprep.subr.mxu0 0.0
        %568 = vmatpush1.msra.mxu0 %v551
        %569 = vmatprep.subr.mxu0 0.0
        %570 = vmatpush1.msra.mxu0 %v552
        %571 = vmatprep.subr.mxu0 0.0
        %572 = vmatpush1.msra.mxu0 %v553
        %573 = vmatprep.subr.mxu0 0.0
        %574 = vmatpush1.msra.mxu0 %v554
        %575 = vmatprep.subr.mxu0 0.0
        %576 = vmatpush1.msra.mxu0 0.0
        %577 = vmatprep.subr.mxu0 0.0
        %578 = vmatpush1.msra.mxu0 0.0
        %579 = vmatprep.subr.mxu0 0.0
        %580 = vmatpush1.msra.mxu0 0.0
        %581 = vmatprep.subr.mxu0 0.0
        %582 = vmatpush1.msra.mxu0 0.0
        %583 = vmatprep.subr.mxu0 0.0
        %584 = vmatpush1.msra.mxu0 0.0
        %585 = vmatprep.subr.mxu0 0.0
        %586 = vmatpush1.msra.mxu0 0.0
        %587 = vmatprep.subr.mxu0 0.0
        %588 = vmatpush1.msra.mxu0 0.0
        %589 = vmatprep.subr.mxu0 0.0
        %590 = vmatpush1.msra.mxu0 0.0
        %591 = vmatprep.subr.mxu0 0.0
        %592 = vmatpush1.msra.mxu0 0.0
        %593 = vmatprep.subr.mxu0 0.0
        %594 = vmatpush1.msra.mxu0 0.0
        %595 = vmatprep.subr.mxu0 0.0
        %596 = vmatpush1.msra.mxu0 0.0
        %597 = vmatprep.subr.mxu0 0.0
        %598 = vmatpush1.msra.mxu0 0.0
        %599 = vmatprep.subr.mxu0 0.0
        %600 = vmatpush1.msra.mxu0 0.0
        %601 = vmatprep.subr.mxu0 0.0
        %602 = vmatpush1.msra.mxu0 0.0
        %603 = vmatprep.subr.mxu0 0.0
        %604 = vmatpush1.msra.mxu0 0.0
        %605 = vmatprep.subr.mxu0 0.0
        %606 = vmatpush1.msra.mxu0 0.0
        %607 = vmatprep.subr.mxu0 0.0
        %608 = vmatpush1.msra.mxu0 0.0
        %609 = vmatprep.subr.mxu0 0.0
        %610 = vmatpush1.msra.mxu0 0.0
        %611 = vmatprep.subr.mxu0 0.0
        %612 = vmatpush1.msra.mxu0 0.0
        %613 = vmatprep.subr.mxu0 0.0
        %614 = vmatpush1.msra.mxu0 0.0
        %615 = vmatprep.subr.mxu0 0.0
        %616 = vmatpush1.msra.mxu0 0.0
        %617 = vmatprep.subr.mxu0 0.0
        %618 = vmatpush1.msra.mxu0 0.0
        %619 = vmatprep.subr.mxu0 0.0
        %620 = vmatpush1.msra.mxu0 0.0
        %621 = vmatprep.subr.mxu0 0.0
        %622 = vmatpush1.msra.mxu0 0.0
        %623 = vmatprep.mubr.f32.mxu0 0.0
        %624 = vmatmul.mubr.f32.gmra.mrb[0].mxu0 %v557
        %v625 = vpop.f32.mrb[0].mxu0
        %v626 = vadd.f32 0.0, %v625
        %v627 = vpop.f32.mrb[0].mxu0
        %628 = vdwg.mxu0
        %v630 = vsel %vm555, %v460, 0
        %632 = vmatprep.subr.mxu0 0.0
        %633 = vmatpush1.msra.mxu0 %v463
        %634 = vmatprep.subr.mxu0 0.0
        %635 = vmatpush1.msra.mxu0 %v464
        %636 = vmatprep.subr.mxu0 0.0
        %637 = vmatpush1.msra.mxu0 %v465
        %638 = vmatprep.subr.mxu0 0.0
        %639 = vmatpush1.msra.mxu0 %v466
        %640 = vmatprep.subr.mxu0 0.0
        %641 = vmatpush1.msra.mxu0 %v467
        %642 = vmatprep.subr.mxu0 0.0
        %643 = vmatpush1.msra.mxu0 %v468
        %644 = vmatprep.subr.mxu0 0.0
        %645 = vmatpush1.msra.mxu0 %v469
        %646 = vmatprep.subr.mxu0 0.0
        %647 = vmatpush1.msra.mxu0 %v470
        %648 = vmatprep.subr.mxu0 0.0
        %649 = vmatpush1.msra.mxu0 0.0
        %650 = vmatprep.subr.mxu0 0.0
        %651 = vmatpush1.msra.mxu0 0.0
        %652 = vmatprep.subr.mxu0 0.0
        %653 = vmatpush1.msra.mxu0 0.0
        %654 = vmatprep.subr.mxu0 0.0
        %655 = vmatpush1.msra.mxu0 0.0
        %656 = vmatprep.subr.mxu0 0.0
        %657 = vmatpush1.msra.mxu0 0.0
        %658 = vmatprep.subr.mxu0 0.0
        %659 = vmatpush1.msra.mxu0 0.0
        %660 = vmatprep.subr.mxu0 0.0
        %661 = vmatpush1.msra.mxu0 0.0
        %662 = vmatprep.subr.mxu0 0.0
        %663 = vmatpush1.msra.mxu0 0.0
        %664 = vmatprep.subr.mxu0 0.0
        %665 = vmatpush1.msra.mxu0 0.0
        %666 = vmatprep.subr.mxu0 0.0
        %667 = vmatpush1.msra.mxu0 0.0
        %668 = vmatprep.subr.mxu0 0.0
        %669 = vmatpush1.msra.mxu0 0.0
        %670 = vmatprep.subr.mxu0 0.0
        %671 = vmatpush1.msra.mxu0 0.0
        %672 = vmatprep.subr.mxu0 0.0
        %673 = vmatpush1.msra.mxu0 0.0
        %674 = vmatprep.subr.mxu0 0.0
        %675 = vmatpush1.msra.mxu0 0.0
        %676 = vmatprep.subr.mxu0 0.0
        %677 = vmatpush1.msra.mxu0 0.0
        %678 = vmatprep.subr.mxu0 0.0
        %679 = vmatpush1.msra.mxu0 0.0
        %680 = vmatprep.subr.mxu0 0.0
        %681 = vmatpush1.msra.mxu0 0.0
        %682 = vmatprep.subr.mxu0 0.0
        %683 = vmatpush1.msra.mxu0 0.0
        %684 = vmatprep.subr.mxu0 0.0
        %685 = vmatpush1.msra.mxu0 0.0
        %686 = vmatprep.subr.mxu0 0.0
        %687 = vmatpush1.msra.mxu0 0.0
        %688 = vmatprep.subr.mxu0 0.0
        %689 = vmatpush1.msra.mxu0 0.0
        %690 = vmatprep.subr.mxu0 0.0
        %691 = vmatpush1.msra.mxu0 0.0
        %692 = vmatprep.subr.mxu0 0.0
        %693 = vmatpush1.msra.mxu0 0.0
        %694 = vmatprep.subr.mxu0 0.0
        %695 = vmatpush1.msra.mxu0 0.0
        %696 = vmatprep.mubr.f32.mxu0 0.0
        %697 = vmatmul.mubr.f32.gmra.mrb[0].mxu0 %v630
        %v698 = vpop.f32.mrb[0].mxu0
        %v699 = vadd.f32 %v626, %v698
        %v700 = vpop.f32.mrb[0].mxu0
        %701 = vdwg.mxu0
        %s702 = scalar_lea.vmem %s1, 16
        %v703 = vld [vmem:[%s702] sm:$0xff]
        %v705 = vsel %vm389, %v703, 0
        %707 = vmatprep.subr.mxu0 0.0
        %708 = vmatpush1.msra.mxu0 %v386
        %709 = vmatprep.subr.mxu0 0.0
        %710 = vmatpush1.msra.mxu0 %v387
        %711 = vmatprep.subr.mxu0 0.0
        %712 = vmatpush1.msra.mxu0 0.0
        %713 = vmatprep.subr.mxu0 0.0
        %714 = vmatpush1.msra.mxu0 0.0
        %715 = vmatprep.subr.mxu0 0.0
        %716 = vmatpush1.msra.mxu0 0.0
        %717 = vmatprep.subr.mxu0 0.0
        %718 = vmatpush1.msra.mxu0 0.0
        %719 = vmatprep.subr.mxu0 0.0
        %720 = vmatpush1.msra.mxu0 0.0
        %721 = vmatprep.subr.mxu0 0.0
        %722 = vmatpush1.msra.mxu0 0.0
        %723 = vmatprep.subr.mxu0 0.0
        %724 = vmatpush1.msra.mxu0 0.0
        %725 = vmatprep.subr.mxu0 0.0
        %726 = vmatpush1.msra.mxu0 0.0
        %727 = vmatprep.subr.mxu0 0.0
        %728 = vmatpush1.msra.mxu0 0.0
        %729 = vmatprep.subr.mxu0 0.0
        %730 = vmatpush1.msra.mxu0 0.0
        %731 = vmatprep.subr.mxu0 0.0
        %732 = vmatpush1.msra.mxu0 0.0
        %733 = vmatprep.subr.mxu0 0.0
        %734 = vmatpush1.msra.mxu0 0.0
        %735 = vmatprep.subr.mxu0 0.0
        %736 = vmatpush1.msra.mxu0 0.0
        %737 = vmatprep.subr.mxu0 0.0
        %738 = vmatpush1.msra.mxu0 0.0
        %739 = vmatprep.subr.mxu0 0.0
        %740 = vmatpush1.msra.mxu0 0.0
        %741 = vmatprep.subr.mxu0 0.0
        %742 = vmatpush1.msra.mxu0 0.0
        %743 = vmatprep.subr.mxu0 0.0
        %744 = vmatpush1.msra.mxu0 0.0
        %745 = vmatprep.subr.mxu0 0.0
        %746 = vmatpush1.msra.mxu0 0.0
        %747 = vmatprep.subr.mxu0 0.0
        %748 = vmatpush1.msra.mxu0 0.0
        %749 = vmatprep.subr.mxu0 0.0
        %750 = vmatpush1.msra.mxu0 0.0
        %751 = vmatprep.subr.mxu0 0.0
        %752 = vmatpush1.msra.mxu0 0.0
        %753 = vmatprep.subr.mxu0 0.0
        %754 = vmatpush1.msra.mxu0 0.0
        %755 = vmatprep.subr.mxu0 0.0
        %756 = vmatpush1.msra.mxu0 0.0
        %757 = vmatprep.subr.mxu0 0.0
        %758 = vmatpush1.msra.mxu0 0.0
        %759 = vmatprep.subr.mxu0 0.0
        %760 = vmatpush1.msra.mxu0 0.0
        %761 = vmatprep.subr.mxu0 0.0
        %762 = vmatpush1.msra.mxu0 0.0
        %763 = vmatprep.subr.mxu0 0.0
        %764 = vmatpush1.msra.mxu0 0.0
        %765 = vmatprep.subr.mxu0 0.0
        %766 = vmatpush1.msra.mxu0 0.0
        %767 = vmatprep.subr.mxu0 0.0
        %768 = vmatpush1.msra.mxu0 0.0
        %769 = vmatprep.subr.mxu0 0.0
        %770 = vmatpush1.msra.mxu0 0.0
        %771 = vmatprep.mubr.f32.mxu0 0.0
        %772 = vmatmul.mubr.f32.gmra.mrb[0].mxu0 %v705
        %v773 = vpop.f32.mrb[0].mxu0
        %v774 = vadd.f32 0.0, %v773
        %v775 = vpop.f32.mrb[0].mxu0
        %776 = vdwg.mxu0
        %s777 = scalar_lea.vmem [#allocation2], 128
        %v778 = vld [vmem:[%s777] sm:$0xff]
        %v779 = vld [vmem:[%s777 + $0x8] sm:$0xff]
        %v780 = vld [vmem:[%s777 + $0x10] sm:$0xff]
        %v781 = vld [vmem:[%s777 + $0x18] sm:$0xff]
        %v782 = vld [vmem:[%s777 + $0x20] sm:$0xff]
        %v783 = vld [vmem:[%s777 + $0x28] sm:$0xff]
        %v784 = vld [vmem:[%s777 + $0x30] sm:$0xff]
        %v785 = vld [vmem:[%s777 + $0x38] sm:$0xff]
        %v787 = vsel %vm555, %v774, 0
        %789 = vmatprep.subr.mxu0 0.0
        %790 = vmatpush1.msra.mxu0 %v778
        %791 = vmatprep.subr.mxu0 0.0
        %792 = vmatpush1.msra.mxu0 %v779
        %793 = vmatprep.subr.mxu0 0.0
        %794 = vmatpush1.msra.mxu0 %v780
        %795 = vmatprep.subr.mxu0 0.0
        %796 = vmatpush1.msra.mxu0 %v781
        %797 = vmatprep.subr.mxu0 0.0
        %798 = vmatpush1.msra.mxu0 %v782
        %799 = vmatprep.subr.mxu0 0.0
        %800 = vmatpush1.msra.mxu0 %v783
        %801 = vmatprep.subr.mxu0 0.0
        %802 = vmatpush1.msra.mxu0 %v784
        %803 = vmatprep.subr.mxu0 0.0
        %804 = vmatpush1.msra.mxu0 %v785
        %805 = vmatprep.subr.mxu0 0.0
        %806 = vmatpush1.msra.mxu0 0.0
        %807 = vmatprep.subr.mxu0 0.0
        %808 = vmatpush1.msra.mxu0 0.0
        %809 = vmatprep.subr.mxu0 0.0
        %810 = vmatpush1.msra.mxu0 0.0
        %811 = vmatprep.subr.mxu0 0.0
        %812 = vmatpush1.msra.mxu0 0.0
        %813 = vmatprep.subr.mxu0 0.0
        %814 = vmatpush1.msra.mxu0 0.0
        %815 = vmatprep.subr.mxu0 0.0
        %816 = vmatpush1.msra.mxu0 0.0
        %817 = vmatprep.subr.mxu0 0.0
        %818 = vmatpush1.msra.mxu0 0.0
        %819 = vmatprep.subr.mxu0 0.0
        %820 = vmatpush1.msra.mxu0 0.0
        %821 = vmatprep.subr.mxu0 0.0
        %822 = vmatpush1.msra.mxu0 0.0
        %823 = vmatprep.subr.mxu0 0.0
        %824 = vmatpush1.msra.mxu0 0.0
        %825 = vmatprep.subr.mxu0 0.0
        %826 = vmatpush1.msra.mxu0 0.0
        %827 = vmatprep.subr.mxu0 0.0
        %828 = vmatpush1.msra.mxu0 0.0
        %829 = vmatprep.subr.mxu0 0.0
        %830 = vmatpush1.msra.mxu0 0.0
        %831 = vmatprep.subr.mxu0 0.0
        %832 = vmatpush1.msra.mxu0 0.0
        %833 = vmatprep.subr.mxu0 0.0
        %834 = vmatpush1.msra.mxu0 0.0
        %835 = vmatprep.subr.mxu0 0.0
        %836 = vmatpush1.msra.mxu0 0.0
        %837 = vmatprep.subr.mxu0 0.0
        %838 = vmatpush1.msra.mxu0 0.0
        %839 = vmatprep.subr.mxu0 0.0
        %840 = vmatpush1.msra.mxu0 0.0
        %841 = vmatprep.subr.mxu0 0.0
        %842 = vmatpush1.msra.mxu0 0.0
        %843 = vmatprep.subr.mxu0 0.0
        %844 = vmatpush1.msra.mxu0 0.0
        %845 = vmatprep.subr.mxu0 0.0
        %846 = vmatpush1.msra.mxu0 0.0
        %847 = vmatprep.subr.mxu0 0.0
        %848 = vmatpush1.msra.mxu0 0.0
        %849 = vmatprep.subr.mxu0 0.0
        %850 = vmatpush1.msra.mxu0 0.0
        %851 = vmatprep.subr.mxu0 0.0
        %852 = vmatpush1.msra.mxu0 0.0
        %853 = vmatprep.mubr.f32.mxu0 0.0
        %854 = vmatmul.mubr.f32.gmra.mrb[0].mxu0 %v787
        %v855 = vpop.f32.mrb[0].mxu0
        %v856 = vadd.f32 0.0, %v855
        %v857 = vpop.f32.mrb[0].mxu0
        %858 = vdwg.mxu0
        %v859 = vadd.f32 %v699, %v856
        %s860 = scalar_lea.vmem %s1, 24
        %v861 = vld [vmem:[%s860] sm:$0xff]
        %v863 = vsel %vm389, %v861, 0
        %865 = vmatprep.subr.mxu0 0.0
        %866 = vmatpush1.msra.mxu0 %v386
        %867 = vmatprep.subr.mxu0 0.0
        %868 = vmatpush1.msra.mxu0 %v387
        %869 = vmatprep.subr.mxu0 0.0
        %870 = vmatpush1.msra.mxu0 0.0
        %871 = vmatprep.subr.mxu0 0.0
        %872 = vmatpush1.msra.mxu0 0.0
        %873 = vmatprep.subr.mxu0 0.0
        %874 = vmatpush1.msra.mxu0 0.0
        %875 = vmatprep.subr.mxu0 0.0
        %876 = vmatpush1.msra.mxu0 0.0
        %877 = vmatprep.subr.mxu0 0.0
        %878 = vmatpush1.msra.mxu0 0.0
        %879 = vmatprep.subr.mxu0 0.0
        %880 = vmatpush1.msra.mxu0 0.0
        %881 = vmatprep.subr.mxu0 0.0
        %882 = vmatpush1.msra.mxu0 0.0
        %883 = vmatprep.subr.mxu0 0.0
        %884 = vmatpush1.msra.mxu0 0.0
        %885 = vmatprep.subr.mxu0 0.0
        %886 = vmatpush1.msra.mxu0 0.0
        %887 = vmatprep.subr.mxu0 0.0
        %888 = vmatpush1.msra.mxu0 0.0
        %889 = vmatprep.subr.mxu0 0.0
        %890 = vmatpush1.msra.mxu0 0.0
        %891 = vmatprep.subr.mxu0 0.0
        %892 = vmatpush1.msra.mxu0 0.0
        %893 = vmatprep.subr.mxu0 0.0
        %894 = vmatpush1.msra.mxu0 0.0
        %895 = vmatprep.subr.mxu0 0.0
        %896 = vmatpush1.msra.mxu0 0.0
        %897 = vmatprep.subr.mxu0 0.0
        %898 = vmatpush1.msra.mxu0 0.0
        %899 = vmatprep.subr.mxu0 0.0
        %900 = vmatpush1.msra.mxu0 0.0
        %901 = vmatprep.subr.mxu0 0.0
        %902 = vmatpush1.msra.mxu0 0.0
        %903 = vmatprep.subr.mxu0 0.0
        %904 = vmatpush1.msra.mxu0 0.0
        %905 = vmatprep.subr.mxu0 0.0
        %906 = vmatpush1.msra.mxu0 0.0
        %907 = vmatprep.subr.mxu0 0.0
        %908 = vmatpush1.msra.mxu0 0.0
        %909 = vmatprep.subr.mxu0 0.0
        %910 = vmatpush1.msra.mxu0 0.0
        %911 = vmatprep.subr.mxu0 0.0
        %912 = vmatpush1.msra.mxu0 0.0
        %913 = vmatprep.subr.mxu0 0.0
        %914 = vmatpush1.msra.mxu0 0.0
        %915 = vmatprep.subr.mxu0 0.0
        %916 = vmatpush1.msra.mxu0 0.0
        %917 = vmatprep.subr.mxu0 0.0
        %918 = vmatpush1.msra.mxu0 0.0
        %919 = vmatprep.subr.mxu0 0.0
        %920 = vmatpush1.msra.mxu0 0.0
        %921 = vmatprep.subr.mxu0 0.0
        %922 = vmatpush1.msra.mxu0 0.0
        %923 = vmatprep.subr.mxu0 0.0
        %924 = vmatpush1.msra.mxu0 0.0
        %925 = vmatprep.subr.mxu0 0.0
        %926 = vmatpush1.msra.mxu0 0.0
        %927 = vmatprep.subr.mxu0 0.0
        %928 = vmatpush1.msra.mxu0 0.0
        %929 = vmatprep.mubr.f32.mxu0 0.0
        %930 = vmatmul.mubr.f32.gmra.mrb[0].mxu0 %v863
        %v931 = vpop.f32.mrb[0].mxu0
        %v932 = vadd.f32 0.0, %v931
        %v933 = vpop.f32.mrb[0].mxu0
        %934 = vdwg.mxu0
        %s935 = scalar_lea.vmem [#allocation2], 192
        %v936 = vld [vmem:[%s935] sm:$0xff]
        %v937 = vld [vmem:[%s935 + $0x8] sm:$0xff]
        %v938 = vld [vmem:[%s935 + $0x10] sm:$0xff]
        %v939 = vld [vmem:[%s935 + $0x18] sm:$0xff]
        %v940 = vld [vmem:[%s935 + $0x20] sm:$0xff]
        %v941 = vld [vmem:[%s935 + $0x28] sm:$0xff]
        %v942 = vld [vmem:[%s935 + $0x30] sm:$0xff]
        %v943 = vld [vmem:[%s935 + $0x38] sm:$0xff]
        %v945 = vsel %vm555, %v932, 0
        %947 = vmatprep.subr.mxu0 0.0
        %948 = vmatpush1.msra.mxu0 %v936
        %949 = vmatprep.subr.mxu0 0.0
        %950 = vmatpush1.msra.mxu0 %v937
        %951 = vmatprep.subr.mxu0 0.0
        %952 = vmatpush1.msra.mxu0 %v938
        %953 = vmatprep.subr.mxu0 0.0
        %954 = vmatpush1.msra.mxu0 %v939
        %955 = vmatprep.subr.mxu0 0.0
        %956 = vmatpush1.msra.mxu0 %v940
        %957 = vmatprep.subr.mxu0 0.0
        %958 = vmatpush1.msra.mxu0 %v941
        %959 = vmatprep.subr.mxu0 0.0
        %960 = vmatpush1.msra.mxu0 %v942
        %961 = vmatprep.subr.mxu0 0.0
        %962 = vmatpush1.msra.mxu0 %v943
        %963 = vmatprep.subr.mxu0 0.0
        %964 = vmatpush1.msra.mxu0 0.0
        %965 = vmatprep.subr.mxu0 0.0
        %966 = vmatpush1.msra.mxu0 0.0
        %967 = vmatprep.subr.mxu0 0.0
        %968 = vmatpush1.msra.mxu0 0.0
        %969 = vmatprep.subr.mxu0 0.0
        %970 = vmatpush1.msra.mxu0 0.0
        %971 = vmatprep.subr.mxu0 0.0
        %972 = vmatpush1.msra.mxu0 0.0
        %973 = vmatprep.subr.mxu0 0.0
        %974 = vmatpush1.msra.mxu0 0.0
        %975 = vmatprep.subr.mxu0 0.0
        %976 = vmatpush1.msra.mxu0 0.0
        %977 = vmatprep.subr.mxu0 0.0
        %978 = vmatpush1.msra.mxu0 0.0
        %979 = vmatprep.subr.mxu0 0.0
        %980 = vmatpush1.msra.mxu0 0.0
        %981 = vmatprep.subr.mxu0 0.0
        %982 = vmatpush1.msra.mxu0 0.0
        %983 = vmatprep.subr.mxu0 0.0
        %984 = vmatpush1.msra.mxu0 0.0
        %985 = vmatprep.subr.mxu0 0.0
        %986 = vmatpush1.msra.mxu0 0.0
        %987 = vmatprep.subr.mxu0 0.0
        %988 = vmatpush1.msra.mxu0 0.0
        %989 = vmatprep.subr.mxu0 0.0
        %990 = vmatpush1.msra.mxu0 0.0
        %991 = vmatprep.subr.mxu0 0.0
        %992 = vmatpush1.msra.mxu0 0.0
        %993 = vmatprep.subr.mxu0 0.0
        %994 = vmatpush1.msra.mxu0 0.0
        %995 = vmatprep.subr.mxu0 0.0
        %996 = vmatpush1.msra.mxu0 0.0
        %997 = vmatprep.subr.mxu0 0.0
        %998 = vmatpush1.msra.mxu0 0.0
        %999 = vmatprep.subr.mxu0 0.0
        %1000 = vmatpush1.msra.mxu0 0.0
        %1001 = vmatprep.subr.mxu0 0.0
        %1002 = vmatpush1.msra.mxu0 0.0
        %1003 = vmatprep.subr.mxu0 0.0
        %1004 = vmatpush1.msra.mxu0 0.0
        %1005 = vmatprep.subr.mxu0 0.0
        %1006 = vmatpush1.msra.mxu0 0.0
        %1007 = vmatprep.subr.mxu0 0.0
        %1008 = vmatpush1.msra.mxu0 0.0
        %1009 = vmatprep.subr.mxu0 0.0
        %1010 = vmatpush1.msra.mxu0 0.0
        %1011 = vmatprep.mubr.f32.mxu0 0.0
        %1012 = vmatmul.mubr.f32.gmra.mrb[0].mxu0 %v945
        %v1013 = vpop.f32.mrb[0].mxu0
        %v1014 = vadd.f32 0.0, %v1013
        %v1015 = vpop.f32.mrb[0].mxu0
        %1016 = vdwg.mxu0
        %v1017 = vadd.f32 %v859, %v1014
        %v1018 = vld [vmem:[%s3] sm:$0x1]
        %v1020 = vlaneseq
        %v1021 = vshrl.u32 %v1020, 7
        %v1022 = vsub.s32 0, %v1021
        %v1023 = vrot.slane %v1018, %v1022
        %v1025 = vadd.f32 %v1017, %v1023
        %vm1026 = vcmp.ge.f32.partialorder %v1025, 0.0
        %v1027 = vmul.f32 %v1025, 0.2
        %v1028 = vsel %vm1026, %v1025, %v1027
        %v1029 = vld [vmem:[%s4] sm:$0xf]
        %vm1030 = vcmask 64512
        %v1032 = vsel %vm1030, %v1029, 0
        %1034 = vmatprep.subr.mxu0 0.0
        %1035 = vmatpush1.msra.mxu0 %v1028
        %1036 = vmatprep.subr.mxu0 0.0
        %1037 = vmatpush1.msra.mxu0 0.0
        %1038 = vmatprep.subr.mxu0 0.0
        %1039 = vmatpush1.msra.mxu0 0.0
        %1040 = vmatprep.subr.mxu0 0.0
        %1041 = vmatpush1.msra.mxu0 0.0
        %1042 = vmatprep.subr.mxu0 0.0
        %1043 = vmatpush1.msra.mxu0 0.0
        %1044 = vmatprep.subr.mxu0 0.0
        %1045 = vmatpush1.msra.mxu0 0.0
        %1046 = vmatprep.subr.mxu0 0.0
        %1047 = vmatpush1.msra.mxu0 0.0
        %1048 = vmatprep.subr.mxu0 0.0
        %1049 = vmatpush1.msra.mxu0 0.0
        %1050 = vmatprep.subr.mxu0 0.0
        %1051 = vmatpush1.msra.mxu0 0.0
        %1052 = vmatprep.subr.mxu0 0.0
        %1053 = vmatpush1.msra.mxu0 0.0
        %1054 = vmatprep.subr.mxu0 0.0
        %1055 = vmatpush1.msra.mxu0 0.0
        %1056 = vmatprep.subr.mxu0 0.0
        %1057 = vmatpush1.msra.mxu0 0.0
        %1058 = vmatprep.subr.mxu0 0.0
        %1059 = vmatpush1.msra.mxu0 0.0
        %1060 = vmatprep.subr.mxu0 0.0
        %1061 = vmatpush1.msra.mxu0 0.0
        %1062 = vmatprep.subr.mxu0 0.0
        %1063 = vmatpush1.msra.mxu0 0.0
        %1064 = vmatprep.subr.mxu0 0.0
        %1065 = vmatpush1.msra.mxu0 0.0
        %1066 = vmatprep.subr.mxu0 0.0
        %1067 = vmatpush1.msra.mxu0 0.0
        %1068 = vmatprep.subr.mxu0 0.0
        %1069 = vmatpush1.msra.mxu0 0.0
        %1070 = vmatprep.subr.mxu0 0.0
        %1071 = vmatpush1.msra.mxu0 0.0
        %1072 = vmatprep.subr.mxu0 0.0
        %1073 = vmatpush1.msra.mxu0 0.0
        %1074 = vmatprep.subr.mxu0 0.0
        %1075 = vmatpush1.msra.mxu0 0.0
        %1076 = vmatprep.subr.mxu0 0.0
        %1077 = vmatpush1.msra.mxu0 0.0
        %1078 = vmatprep.subr.mxu0 0.0
        %1079 = vmatpush1.msra.mxu0 0.0
        %1080 = vmatprep.subr.mxu0 0.0
        %1081 = vmatpush1.msra.mxu0 0.0
        %1082 = vmatprep.subr.mxu0 0.0
        %1083 = vmatpush1.msra.mxu0 0.0
        %1084 = vmatprep.subr.mxu0 0.0
        %1085 = vmatpush1.msra.mxu0 0.0
        %1086 = vmatprep.subr.mxu0 0.0
        %1087 = vmatpush1.msra.mxu0 0.0
        %1088 = vmatprep.subr.mxu0 0.0
        %1089 = vmatpush1.msra.mxu0 0.0
        %1090 = vmatprep.subr.mxu0 0.0
        %1091 = vmatpush1.msra.mxu0 0.0
        %1092 = vmatprep.subr.mxu0 0.0
        %1093 = vmatpush1.msra.mxu0 0.0
        %1094 = vmatprep.subr.mxu0 0.0
        %1095 = vmatpush1.msra.mxu0 0.0
        %1096 = vmatprep.subr.mxu0 0.0
        %1097 = vmatpush1.msra.mxu0 0.0
        %1098 = vmatprep.mubr.f32.mxu0 0.0
        %1099 = vmatmul.mubr.f32.gmra.mrb[0].mxu0 %v1032
        %v1100 = vpop.f32.mrb[0].mxu0
        %v1101 = vadd.f32 0.0, %v1100
        %v1102 = vpop.f32.mrb[0].mxu0
        %1103 = vdwg.mxu0
        %v1104 = vld [vmem:[#allocation4] sm:$0xff]
        %v1105 = vld [vmem:[#allocation4 + $0x8] sm:$0xff]
        %v1106 = vld [vmem:[#allocation4 + $0x10] sm:$0xff]
        %v1107 = vld [vmem:[#allocation4 + $0x18] sm:$0xff]
        %v1108 = vld [vmem:[#allocation4 + $0x20] sm:$0xff]
        %v1109 = vld [vmem:[#allocation4 + $0x28] sm:$0xff]
        %v1110 = vld [vmem:[#allocation4 + $0x30] sm:$0xff]
        %v1111 = vld [vmem:[#allocation4 + $0x38] sm:$0xff]
        %s1112 = scalar_lea.vmem %s4, 4
        %v1113 = vld [vmem:[%s1112] sm:$0xf]
        %v1115 = vsel %vm1030, %v1113, 0
        %1117 = vmatprep.subr.mxu0 0.0
        %1118 = vmatpush1.msra.mxu0 %v1028
        %1119 = vmatprep.subr.mxu0 0.0
        %1120 = vmatpush1.msra.mxu0 0.0
        %1121 = vmatprep.subr.mxu0 0.0
        %1122 = vmatpush1.msra.mxu0 0.0
        %1123 = vmatprep.subr.mxu0 0.0
        %1124 = vmatpush1.msra.mxu0 0.0
        %1125 = vmatprep.subr.mxu0 0.0
        %1126 = vmatpush1.msra.mxu0 0.0
        %1127 = vmatprep.subr.mxu0 0.0
        %1128 = vmatpush1.msra.mxu0 0.0
        %1129 = vmatprep.subr.mxu0 0.0
        %1130 = vmatpush1.msra.mxu0 0.0
        %1131 = vmatprep.subr.mxu0 0.0
        %1132 = vmatpush1.msra.mxu0 0.0
        %1133 = vmatprep.subr.mxu0 0.0
        %1134 = vmatpush1.msra.mxu0 0.0
        %1135 = vmatprep.subr.mxu0 0.0
        %1136 = vmatpush1.msra.mxu0 0.0
        %1137 = vmatprep.subr.mxu0 0.0
        %1138 = vmatpush1.msra.mxu0 0.0
        %1139 = vmatprep.subr.mxu0 0.0
        %1140 = vmatpush1.msra.mxu0 0.0
        %1141 = vmatprep.subr.mxu0 0.0
        %1142 = vmatpush1.msra.mxu0 0.0
        %1143 = vmatprep.subr.mxu0 0.0
        %1144 = vmatpush1.msra.mxu0 0.0
        %1145 = vmatprep.subr.mxu0 0.0
        %1146 = vmatpush1.msra.mxu0 0.0
        %1147 = vmatprep.subr.mxu0 0.0
        %1148 = vmatpush1.msra.mxu0 0.0
        %1149 = vmatprep.subr.mxu0 0.0
        %1150 = vmatpush1.msra.mxu0 0.0
        %1151 = vmatprep.subr.mxu0 0.0
        %1152 = vmatpush1.msra.mxu0 0.0
        %1153 = vmatprep.subr.mxu0 0.0
        %1154 = vmatpush1.msra.mxu0 0.0
        %1155 = vmatprep.subr.mxu0 0.0
        %1156 = vmatpush1.msra.mxu0 0.0
        %1157 = vmatprep.subr.mxu0 0.0
        %1158 = vmatpush1.msra.mxu0 0.0
        %1159 = vmatprep.subr.mxu0 0.0
        %1160 = vmatpush1.msra.mxu0 0.0
        %1161 = vmatprep.subr.mxu0 0.0
        %1162 = vmatpush1.msra.mxu0 0.0
        %1163 = vmatprep.subr.mxu0 0.0
        %1164 = vmatpush1.msra.mxu0 0.0
        %1165 = vmatprep.subr.mxu0 0.0
        %1166 = vmatpush1.msra.mxu0 0.0
        %1167 = vmatprep.subr.mxu0 0.0
        %1168 = vmatpush1.msra.mxu0 0.0
        %1169 = vmatprep.subr.mxu0 0.0
        %1170 = vmatpush1.msra.mxu0 0.0
        %1171 = vmatprep.subr.mxu0 0.0
        %1172 = vmatpush1.msra.mxu0 0.0
        %1173 = vmatprep.subr.mxu0 0.0
        %1174 = vmatpush1.msra.mxu0 0.0
        %1175 = vmatprep.subr.mxu0 0.0
        %1176 = vmatpush1.msra.mxu0 0.0
        %1177 = vmatprep.subr.mxu0 0.0
        %1178 = vmatpush1.msra.mxu0 0.0
        %1179 = vmatprep.subr.mxu0 0.0
        %1180 = vmatpush1.msra.mxu0 0.0
        %1181 = vmatprep.mubr.f32.mxu0 0.0
        %1182 = vmatmul.mubr.f32.gmra.mrb[0].mxu0 %v1115
        %v1183 = vpop.f32.mrb[0].mxu0
        %v1184 = vadd.f32 0.0, %v1183
        %v1185 = vpop.f32.mrb[0].mxu0
        %1186 = vdwg.mxu0
        %s1187 = scalar_lea.vmem [#allocation4], 64
        %v1188 = vld [vmem:[%s1187] sm:$0xff]
        %v1189 = vld [vmem:[%s1187 + $0x8] sm:$0xff]
        %v1190 = vld [vmem:[%s1187 + $0x10] sm:$0xff]
        %v1191 = vld [vmem:[%s1187 + $0x18] sm:$0xff]
        %v1192 = vld [vmem:[%s1187 + $0x20] sm:$0xff]
        %v1193 = vld [vmem:[%s1187 + $0x28] sm:$0xff]
        %v1194 = vld [vmem:[%s1187 + $0x30] sm:$0xff]
        %v1195 = vld [vmem:[%s1187 + $0x38] sm:$0xff]
        %v1197 = vsel %vm555, %v1184, 0
        %1199 = vmatprep.subr.mxu0 0.0
        %1200 = vmatpush1.msra.mxu0 %v1188
        %1201 = vmatprep.subr.mxu0 0.0
        %1202 = vmatpush1.msra.mxu0 %v1189
        %1203 = vmatprep.subr.mxu0 0.0
        %1204 = vmatpush1.msra.mxu0 %v1190
        %1205 = vmatprep.subr.mxu0 0.0
        %1206 = vmatpush1.msra.mxu0 %v1191
        %1207 = vmatprep.subr.mxu0 0.0
        %1208 = vmatpush1.msra.mxu0 %v1192
        %1209 = vmatprep.subr.mxu0 0.0
        %1210 = vmatpush1.msra.mxu0 %v1193
        %1211 = vmatprep.subr.mxu0 0.0
        %1212 = vmatpush1.msra.mxu0 %v1194
        %1213 = vmatprep.subr.mxu0 0.0
        %1214 = vmatpush1.msra.mxu0 %v1195
        %1215 = vmatprep.subr.mxu0 0.0
        %1216 = vmatpush1.msra.mxu0 0.0
        %1217 = vmatprep.subr.mxu0 0.0
        %1218 = vmatpush1.msra.mxu0 0.0
        %1219 = vmatprep.subr.mxu0 0.0
        %1220 = vmatpush1.msra.mxu0 0.0
        %1221 = vmatprep.subr.mxu0 0.0
        %1222 = vmatpush1.msra.mxu0 0.0
        %1223 = vmatprep.subr.mxu0 0.0
        %1224 = vmatpush1.msra.mxu0 0.0
        %1225 = vmatprep.subr.mxu0 0.0
        %1226 = vmatpush1.msra.mxu0 0.0
        %1227 = vmatprep.subr.mxu0 0.0
        %1228 = vmatpush1.msra.mxu0 0.0
        %1229 = vmatprep.subr.mxu0 0.0
        %1230 = vmatpush1.msra.mxu0 0.0
        %1231 = vmatprep.subr.mxu0 0.0
        %1232 = vmatpush1.msra.mxu0 0.0
        %1233 = vmatprep.subr.mxu0 0.0
        %1234 = vmatpush1.msra.mxu0 0.0
        %1235 = vmatprep.subr.mxu0 0.0
        %1236 = vmatpush1.msra.mxu0 0.0
        %1237 = vmatprep.subr.mxu0 0.0
        %1238 = vmatpush1.msra.mxu0 0.0
        %1239 = vmatprep.subr.mxu0 0.0
        %1240 = vmatpush1.msra.mxu0 0.0
        %1241 = vmatprep.subr.mxu0 0.0
        %1242 = vmatpush1.msra.mxu0 0.0
        %1243 = vmatprep.subr.mxu0 0.0
        %1244 = vmatpush1.msra.mxu0 0.0
        %1245 = vmatprep.subr.mxu0 0.0
        %1246 = vmatpush1.msra.mxu0 0.0
        %1247 = vmatprep.subr.mxu0 0.0
        %1248 = vmatpush1.msra.mxu0 0.0
        %1249 = vmatprep.subr.mxu0 0.0
        %1250 = vmatpush1.msra.mxu0 0.0
        %1251 = vmatprep.subr.mxu0 0.0
        %1252 = vmatpush1.msra.mxu0 0.0
        %1253 = vmatprep.subr.mxu0 0.0
        %1254 = vmatpush1.msra.mxu0 0.0
        %1255 = vmatprep.subr.mxu0 0.0
        %1256 = vmatpush1.msra.mxu0 0.0
        %1257 = vmatprep.subr.mxu0 0.0
        %1258 = vmatpush1.msra.mxu0 0.0
        %1259 = vmatprep.subr.mxu0 0.0
        %1260 = vmatpush1.msra.mxu0 0.0
        %1261 = vmatprep.subr.mxu0 0.0
        %1262 = vmatpush1.msra.mxu0 0.0
        %1263 = vmatprep.mubr.f32.mxu0 0.0
        %1264 = vmatmul.mubr.f32.gmra.mrb[0].mxu0 %v1197
        %v1265 = vpop.f32.mrb[0].mxu0
        %v1266 = vadd.f32 0.0, %v1265
        %v1267 = vpop.f32.mrb[0].mxu0
        %1268 = vdwg.mxu0
        %v1270 = vsel %vm555, %v1101, 0
        %1272 = vmatprep.subr.mxu0 0.0
        %1273 = vmatpush1.msra.mxu0 %v1104
        %1274 = vmatprep.subr.mxu0 0.0
        %1275 = vmatpush1.msra.mxu0 %v1105
        %1276 = vmatprep.subr.mxu0 0.0
        %1277 = vmatpush1.msra.mxu0 %v1106
        %1278 = vmatprep.subr.mxu0 0.0
        %1279 = vmatpush1.msra.mxu0 %v1107
        %1280 = vmatprep.subr.mxu0 0.0
        %1281 = vmatpush1.msra.mxu0 %v1108
        %1282 = vmatprep.subr.mxu0 0.0
        %1283 = vmatpush1.msra.mxu0 %v1109
        %1284 = vmatprep.subr.mxu0 0.0
        %1285 = vmatpush1.msra.mxu0 %v1110
        %1286 = vmatprep.subr.mxu0 0.0
        %1287 = vmatpush1.msra.mxu0 %v1111
        %1288 = vmatprep.subr.mxu0 0.0
        %1289 = vmatpush1.msra.mxu0 0.0
        %1290 = vmatprep.subr.mxu0 0.0
        %1291 = vmatpush1.msra.mxu0 0.0
        %1292 = vmatprep.subr.mxu0 0.0
        %1293 = vmatpush1.msra.mxu0 0.0
        %1294 = vmatprep.subr.mxu0 0.0
        %1295 = vmatpush1.msra.mxu0 0.0
        %1296 = vmatprep.subr.mxu0 0.0
        %1297 = vmatpush1.msra.mxu0 0.0
        %1298 = vmatprep.subr.mxu0 0.0
        %1299 = vmatpush1.msra.mxu0 0.0
        %1300 = vmatprep.subr.mxu0 0.0
        %1301 = vmatpush1.msra.mxu0 0.0
        %1302 = vmatprep.subr.mxu0 0.0
        %1303 = vmatpush1.msra.mxu0 0.0
        %1304 = vmatprep.subr.mxu0 0.0
        %1305 = vmatpush1.msra.mxu0 0.0
        %1306 = vmatprep.subr.mxu0 0.0
        %1307 = vmatpush1.msra.mxu0 0.0
        %1308 = vmatprep.subr.mxu0 0.0
        %1309 = vmatpush1.msra.mxu0 0.0
        %1310 = vmatprep.subr.mxu0 0.0
        %1311 = vmatpush1.msra.mxu0 0.0
        %1312 = vmatprep.subr.mxu0 0.0
        %1313 = vmatpush1.msra.mxu0 0.0
        %1314 = vmatprep.subr.mxu0 0.0
        %1315 = vmatpush1.msra.mxu0 0.0
        %1316 = vmatprep.subr.mxu0 0.0
        %1317 = vmatpush1.msra.mxu0 0.0
        %1318 = vmatprep.subr.mxu0 0.0
        %1319 = vmatpush1.msra.mxu0 0.0
        %1320 = vmatprep.subr.mxu0 0.0
        %1321 = vmatpush1.msra.mxu0 0.0
        %1322 = vmatprep.subr.mxu0 0.0
        %1323 = vmatpush1.msra.mxu0 0.0
        %1324 = vmatprep.subr.mxu0 0.0
        %1325 = vmatpush1.msra.mxu0 0.0
        %1326 = vmatprep.subr.mxu0 0.0
        %1327 = vmatpush1.msra.mxu0 0.0
        %1328 = vmatprep.subr.mxu0 0.0
        %1329 = vmatpush1.msra.mxu0 0.0
        %1330 = vmatprep.subr.mxu0 0.0
        %1331 = vmatpush1.msra.mxu0 0.0
        %1332 = vmatprep.subr.mxu0 0.0
        %1333 = vmatpush1.msra.mxu0 0.0
        %1334 = vmatprep.subr.mxu0 0.0
        %1335 = vmatpush1.msra.mxu0 0.0
        %1336 = vmatprep.mubr.f32.mxu0 0.0
        %1337 = vmatmul.mubr.f32.gmra.mrb[0].mxu0 %v1270
        %v1338 = vpop.f32.mrb[0].mxu0
        %v1339 = vadd.f32 %v1266, %v1338
        %v1340 = vpop.f32.mrb[0].mxu0
        %1341 = vdwg.mxu0
        %s1342 = scalar_lea.vmem %s4, 8
        %v1343 = vld [vmem:[%s1342] sm:$0xf]
        %v1345 = vsel %vm1030, %v1343, 0
        %1347 = vmatprep.subr.mxu0 0.0
        %1348 = vmatpush1.msra.mxu0 %v1028
        %1349 = vmatprep.subr.mxu0 0.0
        %1350 = vmatpush1.msra.mxu0 0.0
        %1351 = vmatprep.subr.mxu0 0.0
        %1352 = vmatpush1.msra.mxu0 0.0
        %1353 = vmatprep.subr.mxu0 0.0
        %1354 = vmatpush1.msra.mxu0 0.0
        %1355 = vmatprep.subr.mxu0 0.0
        %1356 = vmatpush1.msra.mxu0 0.0
        %1357 = vmatprep.subr.mxu0 0.0
        %1358 = vmatpush1.msra.mxu0 0.0
        %1359 = vmatprep.subr.mxu0 0.0
        %1360 = vmatpush1.msra.mxu0 0.0
        %1361 = vmatprep.subr.mxu0 0.0
        %1362 = vmatpush1.msra.mxu0 0.0
        %1363 = vmatprep.subr.mxu0 0.0
        %1364 = vmatpush1.msra.mxu0 0.0
        %1365 = vmatprep.subr.mxu0 0.0
        %1366 = vmatpush1.msra.mxu0 0.0
        %1367 = vmatprep.subr.mxu0 0.0
        %1368 = vmatpush1.msra.mxu0 0.0
        %1369 = vmatprep.subr.mxu0 0.0
        %1370 = vmatpush1.msra.mxu0 0.0
        %1371 = vmatprep.subr.mxu0 0.0
        %1372 = vmatpush1.msra.mxu0 0.0
        %1373 = vmatprep.subr.mxu0 0.0
        %1374 = vmatpush1.msra.mxu0 0.0
        %1375 = vmatprep.subr.mxu0 0.0
        %1376 = vmatpush1.msra.mxu0 0.0
        %1377 = vmatprep.subr.mxu0 0.0
        %1378 = vmatpush1.msra.mxu0 0.0
        %1379 = vmatprep.subr.mxu0 0.0
        %1380 = vmatpush1.msra.mxu0 0.0
        %1381 = vmatprep.subr.mxu0 0.0
        %1382 = vmatpush1.msra.mxu0 0.0
        %1383 = vmatprep.subr.mxu0 0.0
        %1384 = vmatpush1.msra.mxu0 0.0
        %1385 = vmatprep.subr.mxu0 0.0
        %1386 = vmatpush1.msra.mxu0 0.0
        %1387 = vmatprep.subr.mxu0 0.0
        %1388 = vmatpush1.msra.mxu0 0.0
        %1389 = vmatprep.subr.mxu0 0.0
        %1390 = vmatpush1.msra.mxu0 0.0
        %1391 = vmatprep.subr.mxu0 0.0
        %1392 = vmatpush1.msra.mxu0 0.0
        %1393 = vmatprep.subr.mxu0 0.0
        %1394 = vmatpush1.msra.mxu0 0.0
        %1395 = vmatprep.subr.mxu0 0.0
        %1396 = vmatpush1.msra.mxu0 0.0
        %1397 = vmatprep.subr.mxu0 0.0
        %1398 = vmatpush1.msra.mxu0 0.0
        %1399 = vmatprep.subr.mxu0 0.0
        %1400 = vmatpush1.msra.mxu0 0.0
        %1401 = vmatprep.subr.mxu0 0.0
        %1402 = vmatpush1.msra.mxu0 0.0
        %1403 = vmatprep.subr.mxu0 0.0
        %1404 = vmatpush1.msra.mxu0 0.0
        %1405 = vmatprep.subr.mxu0 0.0
        %1406 = vmatpush1.msra.mxu0 0.0
        %1407 = vmatprep.subr.mxu0 0.0
        %1408 = vmatpush1.msra.mxu0 0.0
        %1409 = vmatprep.subr.mxu0 0.0
        %1410 = vmatpush1.msra.mxu0 0.0
        %1411 = vmatprep.mubr.f32.mxu0 0.0
        %1412 = vmatmul.mubr.f32.gmra.mrb[0].mxu0 %v1345
        %v1413 = vpop.f32.mrb[0].mxu0
        %v1414 = vadd.f32 0.0, %v1413
        %v1415 = vpop.f32.mrb[0].mxu0
        %1416 = vdwg.mxu0
        %s1417 = scalar_lea.vmem [#allocation4], 128
        %v1418 = vld [vmem:[%s1417] sm:$0xff]
        %v1419 = vld [vmem:[%s1417 + $0x8] sm:$0xff]
        %v1420 = vld [vmem:[%s1417 + $0x10] sm:$0xff]
        %v1421 = vld [vmem:[%s1417 + $0x18] sm:$0xff]
        %v1422 = vld [vmem:[%s1417 + $0x20] sm:$0xff]
        %v1423 = vld [vmem:[%s1417 + $0x28] sm:$0xff]
        %v1424 = vld [vmem:[%s1417 + $0x30] sm:$0xff]
        %v1425 = vld [vmem:[%s1417 + $0x38] sm:$0xff]
        %v1427 = vsel %vm555, %v1414, 0
        %1429 = vmatprep.subr.mxu0 0.0
        %1430 = vmatpush1.msra.mxu0 %v1418
        %1431 = vmatprep.subr.mxu0 0.0
        %1432 = vmatpush1.msra.mxu0 %v1419
        %1433 = vmatprep.subr.mxu0 0.0
        %1434 = vmatpush1.msra.mxu0 %v1420
        %1435 = vmatprep.subr.mxu0 0.0
        %1436 = vmatpush1.msra.mxu0 %v1421
        %1437 = vmatprep.subr.mxu0 0.0
        %1438 = vmatpush1.msra.mxu0 %v1422
        %1439 = vmatprep.subr.mxu0 0.0
        %1440 = vmatpush1.msra.mxu0 %v1423
        %1441 = vmatprep.subr.mxu0 0.0
        %1442 = vmatpush1.msra.mxu0 %v1424
        %1443 = vmatprep.subr.mxu0 0.0
        %1444 = vmatpush1.msra.mxu0 %v1425
        %1445 = vmatprep.subr.mxu0 0.0
        %1446 = vmatpush1.msra.mxu0 0.0
        %1447 = vmatprep.subr.mxu0 0.0
        %1448 = vmatpush1.msra.mxu0 0.0
        %1449 = vmatprep.subr.mxu0 0.0
        %1450 = vmatpush1.msra.mxu0 0.0
        %1451 = vmatprep.subr.mxu0 0.0
        %1452 = vmatpush1.msra.mxu0 0.0
        %1453 = vmatprep.subr.mxu0 0.0
        %1454 = vmatpush1.msra.mxu0 0.0
        %1455 = vmatprep.subr.mxu0 0.0
        %1456 = vmatpush1.msra.mxu0 0.0
        %1457 = vmatprep.subr.mxu0 0.0
        %1458 = vmatpush1.msra.mxu0 0.0
        %1459 = vmatprep.subr.mxu0 0.0
        %1460 = vmatpush1.msra.mxu0 0.0
        %1461 = vmatprep.subr.mxu0 0.0
        %1462 = vmatpush1.msra.mxu0 0.0
        %1463 = vmatprep.subr.mxu0 0.0
        %1464 = vmatpush1.msra.mxu0 0.0
        %1465 = vmatprep.subr.mxu0 0.0
        %1466 = vmatpush1.msra.mxu0 0.0
        %1467 = vmatprep.subr.mxu0 0.0
        %1468 = vmatpush1.msra.mxu0 0.0
        %1469 = vmatprep.subr.mxu0 0.0
        %1470 = vmatpush1.msra.mxu0 0.0
        %1471 = vmatprep.subr.mxu0 0.0
        %1472 = vmatpush1.msra.mxu0 0.0
        %1473 = vmatprep.subr.mxu0 0.0
        %1474 = vmatpush1.msra.mxu0 0.0
        %1475 = vmatprep.subr.mxu0 0.0
        %1476 = vmatpush1.msra.mxu0 0.0
        %1477 = vmatprep.subr.mxu0 0.0
        %1478 = vmatpush1.msra.mxu0 0.0
        %1479 = vmatprep.subr.mxu0 0.0
        %1480 = vmatpush1.msra.mxu0 0.0
        %1481 = vmatprep.subr.mxu0 0.0
        %1482 = vmatpush1.msra.mxu0 0.0
        %1483 = vmatprep.subr.mxu0 0.0
        %1484 = vmatpush1.msra.mxu0 0.0
        %1485 = vmatprep.subr.mxu0 0.0
        %1486 = vmatpush1.msra.mxu0 0.0
        %1487 = vmatprep.subr.mxu0 0.0
        %1488 = vmatpush1.msra.mxu0 0.0
        %1489 = vmatprep.subr.mxu0 0.0
        %1490 = vmatpush1.msra.mxu0 0.0
        %1491 = vmatprep.subr.mxu0 0.0
        %1492 = vmatpush1.msra.mxu0 0.0
        %1493 = vmatprep.mubr.f32.mxu0 0.0
        %1494 = vmatmul.mubr.f32.gmra.mrb[0].mxu0 %v1427
        %v1495 = vpop.f32.mrb[0].mxu0
        %v1496 = vadd.f32 0.0, %v1495
        %v1497 = vpop.f32.mrb[0].mxu0
        %1498 = vdwg.mxu0
        %v1499 = vadd.f32 %v1339, %v1496
        %s1500 = scalar_lea.vmem %s4, 12
        %v1501 = vld [vmem:[%s1500] sm:$0xf]
        %v1503 = vsel %vm1030, %v1501, 0
        %1505 = vmatprep.subr.mxu0 0.0
        %1506 = vmatpush1.msra.mxu0 %v1028
        %1507 = vmatprep.subr.mxu0 0.0
        %1508 = vmatpush1.msra.mxu0 0.0
        %1509 = vmatprep.subr.mxu0 0.0
        %1510 = vmatpush1.msra.mxu0 0.0
        %1511 = vmatprep.subr.mxu0 0.0
        %1512 = vmatpush1.msra.mxu0 0.0
        %1513 = vmatprep.subr.mxu0 0.0
        %1514 = vmatpush1.msra.mxu0 0.0
        %1515 = vmatprep.subr.mxu0 0.0
        %1516 = vmatpush1.msra.mxu0 0.0
        %1517 = vmatprep.subr.mxu0 0.0
        %1518 = vmatpush1.msra.mxu0 0.0
        %1519 = vmatprep.subr.mxu0 0.0
        %1520 = vmatpush1.msra.mxu0 0.0
        %1521 = vmatprep.subr.mxu0 0.0
        %1522 = vmatpush1.msra.mxu0 0.0
        %1523 = vmatprep.subr.mxu0 0.0
        %1524 = vmatpush1.msra.mxu0 0.0
        %1525 = vmatprep.subr.mxu0 0.0
        %1526 = vmatpush1.msra.mxu0 0.0
        %1527 = vmatprep.subr.mxu0 0.0
        %1528 = vmatpush1.msra.mxu0 0.0
        %1529 = vmatprep.subr.mxu0 0.0
        %1530 = vmatpush1.msra.mxu0 0.0
        %1531 = vmatprep.subr.mxu0 0.0
        %1532 = vmatpush1.msra.mxu0 0.0
        %1533 = vmatprep.subr.mxu0 0.0
        %1534 = vmatpush1.msra.mxu0 0.0
        %1535 = vmatprep.subr.mxu0 0.0
        %1536 = vmatpush1.msra.mxu0 0.0
        %1537 = vmatprep.subr.mxu0 0.0
        %1538 = vmatpush1.msra.mxu0 0.0
        %1539 = vmatprep.subr.mxu0 0.0
        %1540 = vmatpush1.msra.mxu0 0.0
        %1541 = vmatprep.subr.mxu0 0.0
        %1542 = vmatpush1.msra.mxu0 0.0
        %1543 = vmatprep.subr.mxu0 0.0
        %1544 = vmatpush1.msra.mxu0 0.0
        %1545 = vmatprep.subr.mxu0 0.0
        %1546 = vmatpush1.msra.mxu0 0.0
        %1547 = vmatprep.subr.mxu0 0.0
        %1548 = vmatpush1.msra.mxu0 0.0
        %1549 = vmatprep.subr.mxu0 0.0
        %1550 = vmatpush1.msra.mxu0 0.0
        %1551 = vmatprep.subr.mxu0 0.0
        %1552 = vmatpush1.msra.mxu0 0.0
        %1553 = vmatprep.subr.mxu0 0.0
        %1554 = vmatpush1.msra.mxu0 0.0
        %1555 = vmatprep.subr.mxu0 0.0
        %1556 = vmatpush1.msra.mxu0 0.0
        %1557 = vmatprep.subr.mxu0 0.0
        %1558 = vmatpush1.msra.mxu0 0.0
        %1559 = vmatprep.subr.mxu0 0.0
        %1560 = vmatpush1.msra.mxu0 0.0
        %1561 = vmatprep.subr.mxu0 0.0
        %1562 = vmatpush1.msra.mxu0 0.0
        %1563 = vmatprep.subr.mxu0 0.0
        %1564 = vmatpush1.msra.mxu0 0.0
        %1565 = vmatprep.subr.mxu0 0.0
        %1566 = vmatpush1.msra.mxu0 0.0
        %1567 = vmatprep.subr.mxu0 0.0
        %1568 = vmatpush1.msra.mxu0 0.0
        %1569 = vmatprep.mubr.f32.mxu0 0.0
        %1570 = vmatmul.mubr.f32.gmra.mrb[0].mxu0 %v1503
        %v1571 = vpop.f32.mrb[0].mxu0
        %v1572 = vadd.f32 0.0, %v1571
        %v1573 = vpop.f32.mrb[0].mxu0
        %1574 = vdwg.mxu0
        %s1575 = scalar_lea.vmem [#allocation4], 192
        %v1576 = vld [vmem:[%s1575] sm:$0xff]
        %v1577 = vld [vmem:[%s1575 + $0x8] sm:$0xff]
        %v1578 = vld [vmem:[%s1575 + $0x10] sm:$0xff]
        %v1579 = vld [vmem:[%s1575 + $0x18] sm:$0xff]
        %v1580 = vld [vmem:[%s1575 + $0x20] sm:$0xff]
        %v1581 = vld [vmem:[%s1575 + $0x28] sm:$0xff]
        %v1582 = vld [vmem:[%s1575 + $0x30] sm:$0xff]
        %v1583 = vld [vmem:[%s1575 + $0x38] sm:$0xff]
        %v1585 = vsel %vm555, %v1572, 0
        %1587 = vmatprep.subr.mxu0 0.0
        %1588 = vmatpush1.msra.mxu0 %v1576
        %1589 = vmatprep.subr.mxu0 0.0
        %1590 = vmatpush1.msra.mxu0 %v1577
        %1591 = vmatprep.subr.mxu0 0.0
        %1592 = vmatpush1.msra.mxu0 %v1578
        %1593 = vmatprep.subr.mxu0 0.0
        %1594 = vmatpush1.msra.mxu0 %v1579
        %1595 = vmatprep.subr.mxu0 0.0
        %1596 = vmatpush1.msra.mxu0 %v1580
        %1597 = vmatprep.subr.mxu0 0.0
        %1598 = vmatpush1.msra.mxu0 %v1581
        %1599 = vmatprep.subr.mxu0 0.0
        %1600 = vmatpush1.msra.mxu0 %v1582
        %1601 = vmatprep.subr.mxu0 0.0
        %1602 = vmatpush1.msra.mxu0 %v1583
        %1603 = vmatprep.subr.mxu0 0.0
        %1604 = vmatpush1.msra.mxu0 0.0
        %1605 = vmatprep.subr.mxu0 0.0
        %1606 = vmatpush1.msra.mxu0 0.0
        %1607 = vmatprep.subr.mxu0 0.0
        %1608 = vmatpush1.msra.mxu0 0.0
        %1609 = vmatprep.subr.mxu0 0.0
        %1610 = vmatpush1.msra.mxu0 0.0
        %1611 = vmatprep.subr.mxu0 0.0
        %1612 = vmatpush1.msra.mxu0 0.0
        %1613 = vmatprep.subr.mxu0 0.0
        %1614 = vmatpush1.msra.mxu0 0.0
        %1615 = vmatprep.subr.mxu0 0.0
        %1616 = vmatpush1.msra.mxu0 0.0
        %1617 = vmatprep.subr.mxu0 0.0
        %1618 = vmatpush1.msra.mxu0 0.0
        %1619 = vmatprep.subr.mxu0 0.0
        %1620 = vmatpush1.msra.mxu0 0.0
        %1621 = vmatprep.subr.mxu0 0.0
        %1622 = vmatpush1.msra.mxu0 0.0
        %1623 = vmatprep.subr.mxu0 0.0
        %1624 = vmatpush1.msra.mxu0 0.0
        %1625 = vmatprep.subr.mxu0 0.0
        %1626 = vmatpush1.msra.mxu0 0.0
        %1627 = vmatprep.subr.mxu0 0.0
        %1628 = vmatpush1.msra.mxu0 0.0
        %1629 = vmatprep.subr.mxu0 0.0
        %1630 = vmatpush1.msra.mxu0 0.0
        %1631 = vmatprep.subr.mxu0 0.0
        %1632 = vmatpush1.msra.mxu0 0.0
        %1633 = vmatprep.subr.mxu0 0.0
        %1634 = vmatpush1.msra.mxu0 0.0
        %1635 = vmatprep.subr.mxu0 0.0
        %1636 = vmatpush1.msra.mxu0 0.0
        %1637 = vmatprep.subr.mxu0 0.0
        %1638 = vmatpush1.msra.mxu0 0.0
        %1639 = vmatprep.subr.mxu0 0.0
        %1640 = vmatpush1.msra.mxu0 0.0
        %1641 = vmatprep.subr.mxu0 0.0
        %1642 = vmatpush1.msra.mxu0 0.0
        %1643 = vmatprep.subr.mxu0 0.0
        %1644 = vmatpush1.msra.mxu0 0.0
        %1645 = vmatprep.subr.mxu0 0.0
        %1646 = vmatpush1.msra.mxu0 0.0
        %1647 = vmatprep.subr.mxu0 0.0
        %1648 = vmatpush1.msra.mxu0 0.0
        %1649 = vmatprep.subr.mxu0 0.0
        %1650 = vmatpush1.msra.mxu0 0.0
        %1651 = vmatprep.mubr.f32.mxu0 0.0
        %1652 = vmatmul.mubr.f32.gmra.mrb[0].mxu0 %v1585
        %v1653 = vpop.f32.mrb[0].mxu0
        %v1654 = vadd.f32 0.0, %v1653
        %v1655 = vpop.f32.mrb[0].mxu0
        %1656 = vdwg.mxu0
        %v1657 = vadd.f32 %v1499, %v1654
        %v1658 = vld [vmem:[%s6] sm:$0x1]
        %v1660 = vlaneseq
        %v1661 = vshrl.u32 %v1660, 7
        %v1662 = vsub.s32 0, %v1661
        %v1663 = vrot.slane %v1658, %v1662
        %v1665 = vadd.f32 %v1657, %v1663
        %vm1666 = vcmp.ge.f32.partialorder %v1665, 0.0
        %v1667 = vmul.f32 %v1665, 0.2
        %v1668 = vsel %vm1666, %v1665, %v1667
        %v1669 = vld [vmem:[%s7] sm:$0x1]
        %vm1670 = vcmask 31744
        %v1672 = vsel %vm1670, %v1669, 0
        %vm1674 = vcmask 1043456
        %v1676 = vsel %vm1674, %v1668, 0
        %1678 = vmatprep.subr.mxu0 0.0
        %1679 = vmatpush1.msra.mxu0 %v1676
        %1680 = vmatprep.subr.mxu0 0.0
        %1681 = vmatpush1.msra.mxu0 0.0
        %1682 = vmatprep.subr.mxu0 0.0
        %1683 = vmatpush1.msra.mxu0 0.0
        %1684 = vmatprep.subr.mxu0 0.0
        %1685 = vmatpush1.msra.mxu0 0.0
        %1686 = vmatprep.subr.mxu0 0.0
        %1687 = vmatpush1.msra.mxu0 0.0
        %1688 = vmatprep.subr.mxu0 0.0
        %1689 = vmatpush1.msra.mxu0 0.0
        %1690 = vmatprep.subr.mxu0 0.0
        %1691 = vmatpush1.msra.mxu0 0.0
        %1692 = vmatprep.subr.mxu0 0.0
        %1693 = vmatpush1.msra.mxu0 0.0
        %1694 = vmatprep.subr.mxu0 0.0
        %1695 = vmatpush1.msra.mxu0 0.0
        %1696 = vmatprep.subr.mxu0 0.0
        %1697 = vmatpush1.msra.mxu0 0.0
        %1698 = vmatprep.subr.mxu0 0.0
        %1699 = vmatpush1.msra.mxu0 0.0
        %1700 = vmatprep.subr.mxu0 0.0
        %1701 = vmatpush1.msra.mxu0 0.0
        %1702 = vmatprep.subr.mxu0 0.0
        %1703 = vmatpush1.msra.mxu0 0.0
        %1704 = vmatprep.subr.mxu0 0.0
        %1705 = vmatpush1.msra.mxu0 0.0
        %1706 = vmatprep.subr.mxu0 0.0
        %1707 = vmatpush1.msra.mxu0 0.0
        %1708 = vmatprep.subr.mxu0 0.0
        %1709 = vmatpush1.msra.mxu0 0.0
        %1710 = vmatprep.subr.mxu0 0.0
        %1711 = vmatpush1.msra.mxu0 0.0
        %1712 = vmatprep.subr.mxu0 0.0
        %1713 = vmatpush1.msra.mxu0 0.0
        %1714 = vmatprep.subr.mxu0 0.0
        %1715 = vmatpush1.msra.mxu0 0.0
        %1716 = vmatprep.subr.mxu0 0.0
        %1717 = vmatpush1.msra.mxu0 0.0
        %1718 = vmatprep.subr.mxu0 0.0
        %1719 = vmatpush1.msra.mxu0 0.0
        %1720 = vmatprep.subr.mxu0 0.0
        %1721 = vmatpush1.msra.mxu0 0.0
        %1722 = vmatprep.subr.mxu0 0.0
        %1723 = vmatpush1.msra.mxu0 0.0
        %1724 = vmatprep.subr.mxu0 0.0
        %1725 = vmatpush1.msra.mxu0 0.0
        %1726 = vmatprep.subr.mxu0 0.0
        %1727 = vmatpush1.msra.mxu0 0.0
        %1728 = vmatprep.subr.mxu0 0.0
        %1729 = vmatpush1.msra.mxu0 0.0
        %1730 = vmatprep.subr.mxu0 0.0
        %1731 = vmatpush1.msra.mxu0 0.0
        %1732 = vmatprep.subr.mxu0 0.0
        %1733 = vmatpush1.msra.mxu0 0.0
        %1734 = vmatprep.subr.mxu0 0.0
        %1735 = vmatpush1.msra.mxu0 0.0
        %1736 = vmatprep.subr.mxu0 0.0
        %1737 = vmatpush1.msra.mxu0 0.0
        %1738 = vmatprep.subr.mxu0 0.0
        %1739 = vmatpush1.msra.mxu0 0.0
        %1740 = vmatprep.subr.mxu0 0.0
        %1741 = vmatpush1.msra.mxu0 0.0
        %1742 = vmatprep.mubr.f32.mxu0 0.0
        %1743 = vmatmul.mubr.f32.gmra.mrb[0].mxu0 %v1672
        %v1744 = vpop.f32.mrb[0].mxu0
        %v1745 = vadd.f32 0.0, %v1744
        %v1746 = vpop.f32.mrb[0].mxu0
        %1747 = vdwg.mxu0
        %v1748 = vld [vmem:[%s8] sm:$0xff]
        %v1749 = vld [vmem:[%s8 + $0x8] sm:$0xff]
        %v1750 = vld [vmem:[%s8 + $0x10] sm:$0xff]
        %v1751 = vld [vmem:[%s8 + $0x18] sm:$0xff]
        %v1752 = vld [vmem:[%s8 + $0x20] sm:$0xff]
        %v1753 = vld [vmem:[%s8 + $0x28] sm:$0xff]
        %v1754 = vld [vmem:[%s8 + $0x30] sm:$0xff]
        %v1755 = vld [vmem:[%s8 + $0x38] sm:$0xff]
        %s1756 = scalar_lea.vmem %s7, 1
        %v1757 = vld [vmem:[%s1756] sm:$0x1]
        %v1759 = vsel %vm1670, %v1757, 0
        %1761 = vmatprep.subr.mxu0 0.0
        %1762 = vmatpush1.msra.mxu0 %v1676
        %1763 = vmatprep.subr.mxu0 0.0
        %1764 = vmatpush1.msra.mxu0 0.0
        %1765 = vmatprep.subr.mxu0 0.0
        %1766 = vmatpush1.msra.mxu0 0.0
        %1767 = vmatprep.subr.mxu0 0.0
        %1768 = vmatpush1.msra.mxu0 0.0
        %1769 = vmatprep.subr.mxu0 0.0
        %1770 = vmatpush1.msra.mxu0 0.0
        %1771 = vmatprep.subr.mxu0 0.0
        %1772 = vmatpush1.msra.mxu0 0.0
        %1773 = vmatprep.subr.mxu0 0.0
        %1774 = vmatpush1.msra.mxu0 0.0
        %1775 = vmatprep.subr.mxu0 0.0
        %1776 = vmatpush1.msra.mxu0 0.0
        %1777 = vmatprep.subr.mxu0 0.0
        %1778 = vmatpush1.msra.mxu0 0.0
        %1779 = vmatprep.subr.mxu0 0.0
        %1780 = vmatpush1.msra.mxu0 0.0
        %1781 = vmatprep.subr.mxu0 0.0
        %1782 = vmatpush1.msra.mxu0 0.0
        %1783 = vmatprep.subr.mxu0 0.0
        %1784 = vmatpush1.msra.mxu0 0.0
        %1785 = vmatprep.subr.mxu0 0.0
        %1786 = vmatpush1.msra.mxu0 0.0
        %1787 = vmatprep.subr.mxu0 0.0
        %1788 = vmatpush1.msra.mxu0 0.0
        %1789 = vmatprep.subr.mxu0 0.0
        %1790 = vmatpush1.msra.mxu0 0.0
        %1791 = vmatprep.subr.mxu0 0.0
        %1792 = vmatpush1.msra.mxu0 0.0
        %1793 = vmatprep.subr.mxu0 0.0
        %1794 = vmatpush1.msra.mxu0 0.0
        %1795 = vmatprep.subr.mxu0 0.0
        %1796 = vmatpush1.msra.mxu0 0.0
        %1797 = vmatprep.subr.mxu0 0.0
        %1798 = vmatpush1.msra.mxu0 0.0
        %1799 = vmatprep.subr.mxu0 0.0
        %1800 = vmatpush1.msra.mxu0 0.0
        %1801 = vmatprep.subr.mxu0 0.0
        %1802 = vmatpush1.msra.mxu0 0.0
        %1803 = vmatprep.subr.mxu0 0.0
        %1804 = vmatpush1.msra.mxu0 0.0
        %1805 = vmatprep.subr.mxu0 0.0
        %1806 = vmatpush1.msra.mxu0 0.0
        %1807 = vmatprep.subr.mxu0 0.0
        %1808 = vmatpush1.msra.mxu0 0.0
        %1809 = vmatprep.subr.mxu0 0.0
        %1810 = vmatpush1.msra.mxu0 0.0
        %1811 = vmatprep.subr.mxu0 0.0
        %1812 = vmatpush1.msra.mxu0 0.0
        %1813 = vmatprep.subr.mxu0 0.0
        %1814 = vmatpush1.msra.mxu0 0.0
        %1815 = vmatprep.subr.mxu0 0.0
        %1816 = vmatpush1.msra.mxu0 0.0
        %1817 = vmatprep.subr.mxu0 0.0
        %1818 = vmatpush1.msra.mxu0 0.0
        %1819 = vmatprep.subr.mxu0 0.0
        %1820 = vmatpush1.msra.mxu0 0.0
        %1821 = vmatprep.subr.mxu0 0.0
        %1822 = vmatpush1.msra.mxu0 0.0
        %1823 = vmatprep.subr.mxu0 0.0
        %1824 = vmatpush1.msra.mxu0 0.0
        %1825 = vmatprep.mubr.f32.mxu0 0.0
        %1826 = vmatmul.mubr.f32.gmra.mrb[0].mxu0 %v1759
        %v1827 = vpop.f32.mrb[0].mxu0
        %v1828 = vadd.f32 0.0, %v1827
        %v1829 = vpop.f32.mrb[0].mxu0
        %1830 = vdwg.mxu0
        %s1831 = scalar_lea.vmem %s8, 64
        %v1832 = vld [vmem:[%s1831] sm:$0xff]
        %v1833 = vld [vmem:[%s1831 + $0x8] sm:$0xff]
        %v1834 = vld [vmem:[%s1831 + $0x10] sm:$0xff]
        %v1835 = vld [vmem:[%s1831 + $0x18] sm:$0xff]
        %v1836 = vld [vmem:[%s1831 + $0x20] sm:$0xff]
        %v1837 = vld [vmem:[%s1831 + $0x28] sm:$0xff]
        %v1838 = vld [vmem:[%s1831 + $0x30] sm:$0xff]
        %v1839 = vld [vmem:[%s1831 + $0x38] sm:$0xff]
        %v1841 = vsel %vm555, %v1828, 0
        %1843 = vmatprep.subr.mxu0 0.0
        %1844 = vmatpush1.msra.mxu0 %v1832
        %1845 = vmatprep.subr.mxu0 0.0
        %1846 = vmatpush1.msra.mxu0 %v1833
        %1847 = vmatprep.subr.mxu0 0.0
        %1848 = vmatpush1.msra.mxu0 %v1834
        %1849 = vmatprep.subr.mxu0 0.0
        %1850 = vmatpush1.msra.mxu0 %v1835
        %1851 = vmatprep.subr.mxu0 0.0
        %1852 = vmatpush1.msra.mxu0 %v1836
        %1853 = vmatprep.subr.mxu0 0.0
        %1854 = vmatpush1.msra.mxu0 %v1837
        %1855 = vmatprep.subr.mxu0 0.0
        %1856 = vmatpush1.msra.mxu0 %v1838
        %1857 = vmatprep.subr.mxu0 0.0
        %1858 = vmatpush1.msra.mxu0 %v1839
        %1859 = vmatprep.subr.mxu0 0.0
        %1860 = vmatpush1.msra.mxu0 0.0
        %1861 = vmatprep.subr.mxu0 0.0
        %1862 = vmatpush1.msra.mxu0 0.0
        %1863 = vmatprep.subr.mxu0 0.0
        %1864 = vmatpush1.msra.mxu0 0.0
        %1865 = vmatprep.subr.mxu0 0.0
        %1866 = vmatpush1.msra.mxu0 0.0
        %1867 = vmatprep.subr.mxu0 0.0
        %1868 = vmatpush1.msra.mxu0 0.0
        %1869 = vmatprep.subr.mxu0 0.0
        %1870 = vmatpush1.msra.mxu0 0.0
        %1871 = vmatprep.subr.mxu0 0.0
        %1872 = vmatpush1.msra.mxu0 0.0
        %1873 = vmatprep.subr.mxu0 0.0
        %1874 = vmatpush1.msra.mxu0 0.0
        %1875 = vmatprep.subr.mxu0 0.0
        %1876 = vmatpush1.msra.mxu0 0.0
        %1877 = vmatprep.subr.mxu0 0.0
        %1878 = vmatpush1.msra.mxu0 0.0
        %1879 = vmatprep.subr.mxu0 0.0
        %1880 = vmatpush1.msra.mxu0 0.0
        %1881 = vmatprep.subr.mxu0 0.0
        %1882 = vmatpush1.msra.mxu0 0.0
        %1883 = vmatprep.subr.mxu0 0.0
        %1884 = vmatpush1.msra.mxu0 0.0
        %1885 = vmatprep.subr.mxu0 0.0
        %1886 = vmatpush1.msra.mxu0 0.0
        %1887 = vmatprep.subr.mxu0 0.0
        %1888 = vmatpush1.msra.mxu0 0.0
        %1889 = vmatprep.subr.mxu0 0.0
        %1890 = vmatpush1.msra.mxu0 0.0
        %1891 = vmatprep.subr.mxu0 0.0
        %1892 = vmatpush1.msra.mxu0 0.0
        %1893 = vmatprep.subr.mxu0 0.0
        %1894 = vmatpush1.msra.mxu0 0.0
        %1895 = vmatprep.subr.mxu0 0.0
        %1896 = vmatpush1.msra.mxu0 0.0
        %1897 = vmatprep.subr.mxu0 0.0
        %1898 = vmatpush1.msra.mxu0 0.0
        %1899 = vmatprep.subr.mxu0 0.0
        %1900 = vmatpush1.msra.mxu0 0.0
        %1901 = vmatprep.subr.mxu0 0.0
        %1902 = vmatpush1.msra.mxu0 0.0
        %1903 = vmatprep.subr.mxu0 0.0
        %1904 = vmatpush1.msra.mxu0 0.0
        %1905 = vmatprep.subr.mxu0 0.0
        %1906 = vmatpush1.msra.mxu0 0.0
        %1907 = vmatprep.mubr.f32.mxu0 0.0
        %1908 = vmatmul.mubr.f32.gmra.mrb[0].mxu0 %v1841
        %v1909 = vpop.f32.mrb[0].mxu0
        %v1910 = vadd.f32 0.0, %v1909
        %v1911 = vpop.f32.mrb[0].mxu0
        %1912 = vdwg.mxu0
        %v1914 = vsel %vm555, %v1745, 0
        %1916 = vmatprep.subr.mxu0 0.0
        %1917 = vmatpush1.msra.mxu0 %v1748
        %1918 = vmatprep.subr.mxu0 0.0
        %1919 = vmatpush1.msra.mxu0 %v1749
        %1920 = vmatprep.subr.mxu0 0.0
        %1921 = vmatpush1.msra.mxu0 %v1750
        %1922 = vmatprep.subr.mxu0 0.0
        %1923 = vmatpush1.msra.mxu0 %v1751
        %1924 = vmatprep.subr.mxu0 0.0
        %1925 = vmatpush1.msra.mxu0 %v1752
        %1926 = vmatprep.subr.mxu0 0.0
        %1927 = vmatpush1.msra.mxu0 %v1753
        %1928 = vmatprep.subr.mxu0 0.0
        %1929 = vmatpush1.msra.mxu0 %v1754
        %1930 = vmatprep.subr.mxu0 0.0
        %1931 = vmatpush1.msra.mxu0 %v1755
        %1932 = vmatprep.subr.mxu0 0.0
        %1933 = vmatpush1.msra.mxu0 0.0
        %1934 = vmatprep.subr.mxu0 0.0
        %1935 = vmatpush1.msra.mxu0 0.0
        %1936 = vmatprep.subr.mxu0 0.0
        %1937 = vmatpush1.msra.mxu0 0.0
        %1938 = vmatprep.subr.mxu0 0.0
        %1939 = vmatpush1.msra.mxu0 0.0
        %1940 = vmatprep.subr.mxu0 0.0
        %1941 = vmatpush1.msra.mxu0 0.0
        %1942 = vmatprep.subr.mxu0 0.0
        %1943 = vmatpush1.msra.mxu0 0.0
        %1944 = vmatprep.subr.mxu0 0.0
        %1945 = vmatpush1.msra.mxu0 0.0
        %1946 = vmatprep.subr.mxu0 0.0
        %1947 = vmatpush1.msra.mxu0 0.0
        %1948 = vmatprep.subr.mxu0 0.0
        %1949 = vmatpush1.msra.mxu0 0.0
        %1950 = vmatprep.subr.mxu0 0.0
        %1951 = vmatpush1.msra.mxu0 0.0
        %1952 = vmatprep.subr.mxu0 0.0
        %1953 = vmatpush1.msra.mxu0 0.0
        %1954 = vmatprep.subr.mxu0 0.0
        %1955 = vmatpush1.msra.mxu0 0.0
        %1956 = vmatprep.subr.mxu0 0.0
        %1957 = vmatpush1.msra.mxu0 0.0
        %1958 = vmatprep.subr.mxu0 0.0
        %1959 = vmatpush1.msra.mxu0 0.0
        %1960 = vmatprep.subr.mxu0 0.0
        %1961 = vmatpush1.msra.mxu0 0.0
        %1962 = vmatprep.subr.mxu0 0.0
        %1963 = vmatpush1.msra.mxu0 0.0
        %1964 = vmatprep.subr.mxu0 0.0
        %1965 = vmatpush1.msra.mxu0 0.0
        %1966 = vmatprep.subr.mxu0 0.0
        %1967 = vmatpush1.msra.mxu0 0.0
        %1968 = vmatprep.subr.mxu0 0.0
        %1969 = vmatpush1.msra.mxu0 0.0
        %1970 = vmatprep.subr.mxu0 0.0
        %1971 = vmatpush1.msra.mxu0 0.0
        %1972 = vmatprep.subr.mxu0 0.0
        %1973 = vmatpush1.msra.mxu0 0.0
        %1974 = vmatprep.subr.mxu0 0.0
        %1975 = vmatpush1.msra.mxu0 0.0
        %1976 = vmatprep.subr.mxu0 0.0
        %1977 = vmatpush1.msra.mxu0 0.0
        %1978 = vmatprep.subr.mxu0 0.0
        %1979 = vmatpush1.msra.mxu0 0.0
        %1980 = vmatprep.mubr.f32.mxu0 0.0
        %1981 = vmatmul.mubr.f32.gmra.mrb[0].mxu0 %v1914
        %v1982 = vpop.f32.mrb[0].mxu0
        %v1983 = vadd.f32 %v1910, %v1982
        %v1984 = vpop.f32.mrb[0].mxu0
        %1985 = vdwg.mxu0
        %s1986 = scalar_lea.vmem %s7, 2
        %v1987 = vld [vmem:[%s1986] sm:$0x1]
        %v1989 = vsel %vm1670, %v1987, 0
        %1991 = vmatprep.subr.mxu0 0.0
        %1992 = vmatpush1.msra.mxu0 %v1676
        %1993 = vmatprep.subr.mxu0 0.0
        %1994 = vmatpush1.msra.mxu0 0.0
        %1995 = vmatprep.subr.mxu0 0.0
        %1996 = vmatpush1.msra.mxu0 0.0
        %1997 = vmatprep.subr.mxu0 0.0
        %1998 = vmatpush1.msra.mxu0 0.0
        %1999 = vmatprep.subr.mxu0 0.0
        %2000 = vmatpush1.msra.mxu0 0.0
        %2001 = vmatprep.subr.mxu0 0.0
        %2002 = vmatpush1.msra.mxu0 0.0
        %2003 = vmatprep.subr.mxu0 0.0
        %2004 = vmatpush1.msra.mxu0 0.0
        %2005 = vmatprep.subr.mxu0 0.0
        %2006 = vmatpush1.msra.mxu0 0.0
        %2007 = vmatprep.subr.mxu0 0.0
        %2008 = vmatpush1.msra.mxu0 0.0
        %2009 = vmatprep.subr.mxu0 0.0
        %2010 = vmatpush1.msra.mxu0 0.0
        %2011 = vmatprep.subr.mxu0 0.0
        %2012 = vmatpush1.msra.mxu0 0.0
        %2013 = vmatprep.subr.mxu0 0.0
        %2014 = vmatpush1.msra.mxu0 0.0
        %2015 = vmatprep.subr.mxu0 0.0
        %2016 = vmatpush1.msra.mxu0 0.0
        %2017 = vmatprep.subr.mxu0 0.0
        %2018 = vmatpush1.msra.mxu0 0.0
        %2019 = vmatprep.subr.mxu0 0.0
        %2020 = vmatpush1.msra.mxu0 0.0
        %2021 = vmatprep.subr.mxu0 0.0
        %2022 = vmatpush1.msra.mxu0 0.0
        %2023 = vmatprep.subr.mxu0 0.0
        %2024 = vmatpush1.msra.mxu0 0.0
        %2025 = vmatprep.subr.mxu0 0.0
        %2026 = vmatpush1.msra.mxu0 0.0
        %2027 = vmatprep.subr.mxu0 0.0
        %2028 = vmatpush1.msra.mxu0 0.0
        %2029 = vmatprep.subr.mxu0 0.0
        %2030 = vmatpush1.msra.mxu0 0.0
        %2031 = vmatprep.subr.mxu0 0.0
        %2032 = vmatpush1.msra.mxu0 0.0
        %2033 = vmatprep.subr.mxu0 0.0
        %2034 = vmatpush1.msra.mxu0 0.0
        %2035 = vmatprep.subr.mxu0 0.0
        %2036 = vmatpush1.msra.mxu0 0.0
        %2037 = vmatprep.subr.mxu0 0.0
        %2038 = vmatpush1.msra.mxu0 0.0
        %2039 = vmatprep.subr.mxu0 0.0
        %2040 = vmatpush1.msra.mxu0 0.0
        %2041 = vmatprep.subr.mxu0 0.0
        %2042 = vmatpush1.msra.mxu0 0.0
        %2043 = vmatprep.subr.mxu0 0.0
        %2044 = vmatpush1.msra.mxu0 0.0
        %2045 = vmatprep.subr.mxu0 0.0
        %2046 = vmatpush1.msra.mxu0 0.0
        %2047 = vmatprep.subr.mxu0 0.0
        %2048 = vmatpush1.msra.mxu0 0.0
        %2049 = vmatprep.subr.mxu0 0.0
        %2050 = vmatpush1.msra.mxu0 0.0
        %2051 = vmatprep.subr.mxu0 0.0
        %2052 = vmatpush1.msra.mxu0 0.0
        %2053 = vmatprep.subr.mxu0 0.0
        %2054 = vmatpush1.msra.mxu0 0.0
        %2055 = vmatprep.mubr.f32.mxu0 0.0
        %2056 = vmatmul.mubr.f32.gmra.mrb[0].mxu0 %v1989
        %v2057 = vpop.f32.mrb[0].mxu0
        %v2058 = vadd.f32 0.0, %v2057
        %v2059 = vpop.f32.mrb[0].mxu0
        %2060 = vdwg.mxu0
        %s2061 = scalar_lea.vmem %s8, 128
        %v2062 = vld [vmem:[%s2061] sm:$0xff]
        %v2063 = vld [vmem:[%s2061 + $0x8] sm:$0xff]
        %v2064 = vld [vmem:[%s2061 + $0x10] sm:$0xff]
        %v2065 = vld [vmem:[%s2061 + $0x18] sm:$0xff]
        %v2066 = vld [vmem:[%s2061 + $0x20] sm:$0xff]
        %v2067 = vld [vmem:[%s2061 + $0x28] sm:$0xff]
        %v2068 = vld [vmem:[%s2061 + $0x30] sm:$0xff]
        %v2069 = vld [vmem:[%s2061 + $0x38] sm:$0xff]
        %v2071 = vsel %vm555, %v2058, 0
        %2073 = vmatprep.subr.mxu0 0.0
        %2074 = vmatpush1.msra.mxu0 %v2062
        %2075 = vmatprep.subr.mxu0 0.0
        %2076 = vmatpush1.msra.mxu0 %v2063
        %2077 = vmatprep.subr.mxu0 0.0
        %2078 = vmatpush1.msra.mxu0 %v2064
        %2079 = vmatprep.subr.mxu0 0.0
        %2080 = vmatpush1.msra.mxu0 %v2065
        %2081 = vmatprep.subr.mxu0 0.0
        %2082 = vmatpush1.msra.mxu0 %v2066
        %2083 = vmatprep.subr.mxu0 0.0
        %2084 = vmatpush1.msra.mxu0 %v2067
        %2085 = vmatprep.subr.mxu0 0.0
        %2086 = vmatpush1.msra.mxu0 %v2068
        %2087 = vmatprep.subr.mxu0 0.0
        %2088 = vmatpush1.msra.mxu0 %v2069
        %2089 = vmatprep.subr.mxu0 0.0
        %2090 = vmatpush1.msra.mxu0 0.0
        %2091 = vmatprep.subr.mxu0 0.0
        %2092 = vmatpush1.msra.mxu0 0.0
        %2093 = vmatprep.subr.mxu0 0.0
        %2094 = vmatpush1.msra.mxu0 0.0
        %2095 = vmatprep.subr.mxu0 0.0
        %2096 = vmatpush1.msra.mxu0 0.0
        %2097 = vmatprep.subr.mxu0 0.0
        %2098 = vmatpush1.msra.mxu0 0.0
        %2099 = vmatprep.subr.mxu0 0.0
        %2100 = vmatpush1.msra.mxu0 0.0
        %2101 = vmatprep.subr.mxu0 0.0
        %2102 = vmatpush1.msra.mxu0 0.0
        %2103 = vmatprep.subr.mxu0 0.0
        %2104 = vmatpush1.msra.mxu0 0.0
        %2105 = vmatprep.subr.mxu0 0.0
        %2106 = vmatpush1.msra.mxu0 0.0
        %2107 = vmatprep.subr.mxu0 0.0
        %2108 = vmatpush1.msra.mxu0 0.0
        %2109 = vmatprep.subr.mxu0 0.0
        %2110 = vmatpush1.msra.mxu0 0.0
        %2111 = vmatprep.subr.mxu0 0.0
        %2112 = vmatpush1.msra.mxu0 0.0
        %2113 = vmatprep.subr.mxu0 0.0
        %2114 = vmatpush1.msra.mxu0 0.0
        %2115 = vmatprep.subr.mxu0 0.0
        %2116 = vmatpush1.msra.mxu0 0.0
        %2117 = vmatprep.subr.mxu0 0.0
        %2118 = vmatpush1.msra.mxu0 0.0
        %2119 = vmatprep.subr.mxu0 0.0
        %2120 = vmatpush1.msra.mxu0 0.0
        %2121 = vmatprep.subr.mxu0 0.0
        %2122 = vmatpush1.msra.mxu0 0.0
        %2123 = vmatprep.subr.mxu0 0.0
        %2124 = vmatpush1.msra.mxu0 0.0
        %2125 = vmatprep.subr.mxu0 0.0
        %2126 = vmatpush1.msra.mxu0 0.0
        %2127 = vmatprep.subr.mxu0 0.0
        %2128 = vmatpush1.msra.mxu0 0.0
        %2129 = vmatprep.subr.mxu0 0.0
        %2130 = vmatpush1.msra.mxu0 0.0
        %2131 = vmatprep.subr.mxu0 0.0
        %2132 = vmatpush1.msra.mxu0 0.0
        %2133 = vmatprep.subr.mxu0 0.0
        %2134 = vmatpush1.msra.mxu0 0.0
        %2135 = vmatprep.subr.mxu0 0.0
        %2136 = vmatpush1.msra.mxu0 0.0
        %2137 = vmatprep.mubr.f32.mxu0 0.0
        %2138 = vmatmul.mubr.f32.gmra.mrb[0].mxu0 %v2071
        %v2139 = vpop.f32.mrb[0].mxu0
        %v2140 = vadd.f32 0.0, %v2139
        %v2141 = vpop.f32.mrb[0].mxu0
        %2142 = vdwg.mxu0
        %v2143 = vadd.f32 %v1983, %v2140
        %s2144 = scalar_lea.vmem %s7, 3
        %v2145 = vld [vmem:[%s2144] sm:$0x1]
        %v2147 = vsel %vm1670, %v2145, 0
        %2149 = vmatprep.subr.mxu0 0.0
        %2150 = vmatpush1.msra.mxu0 %v1676
        %2151 = vmatprep.subr.mxu0 0.0
        %2152 = vmatpush1.msra.mxu0 0.0
        %2153 = vmatprep.subr.mxu0 0.0
        %2154 = vmatpush1.msra.mxu0 0.0
        %2155 = vmatprep.subr.mxu0 0.0
        %2156 = vmatpush1.msra.mxu0 0.0
        %2157 = vmatprep.subr.mxu0 0.0
        %2158 = vmatpush1.msra.mxu0 0.0
        %2159 = vmatprep.subr.mxu0 0.0
        %2160 = vmatpush1.msra.mxu0 0.0
        %2161 = vmatprep.subr.mxu0 0.0
        %2162 = vmatpush1.msra.mxu0 0.0
        %2163 = vmatprep.subr.mxu0 0.0
        %2164 = vmatpush1.msra.mxu0 0.0
        %2165 = vmatprep.subr.mxu0 0.0
        %2166 = vmatpush1.msra.mxu0 0.0
        %2167 = vmatprep.subr.mxu0 0.0
        %2168 = vmatpush1.msra.mxu0 0.0
        %2169 = vmatprep.subr.mxu0 0.0
        %2170 = vmatpush1.msra.mxu0 0.0
        %2171 = vmatprep.subr.mxu0 0.0
        %2172 = vmatpush1.msra.mxu0 0.0
        %2173 = vmatprep.subr.mxu0 0.0
        %2174 = vmatpush1.msra.mxu0 0.0
        %2175 = vmatprep.subr.mxu0 0.0
        %2176 = vmatpush1.msra.mxu0 0.0
        %2177 = vmatprep.subr.mxu0 0.0
        %2178 = vmatpush1.msra.mxu0 0.0
        %2179 = vmatprep.subr.mxu0 0.0
        %2180 = vmatpush1.msra.mxu0 0.0
        %2181 = vmatprep.subr.mxu0 0.0
        %2182 = vmatpush1.msra.mxu0 0.0
        %2183 = vmatprep.subr.mxu0 0.0
        %2184 = vmatpush1.msra.mxu0 0.0
        %2185 = vmatprep.subr.mxu0 0.0
        %2186 = vmatpush1.msra.mxu0 0.0
        %2187 = vmatprep.subr.mxu0 0.0
        %2188 = vmatpush1.msra.mxu0 0.0
        %2189 = vmatprep.subr.mxu0 0.0
        %2190 = vmatpush1.msra.mxu0 0.0
        %2191 = vmatprep.subr.mxu0 0.0
        %2192 = vmatpush1.msra.mxu0 0.0
        %2193 = vmatprep.subr.mxu0 0.0
        %2194 = vmatpush1.msra.mxu0 0.0
        %2195 = vmatprep.subr.mxu0 0.0
        %2196 = vmatpush1.msra.mxu0 0.0
        %2197 = vmatprep.subr.mxu0 0.0
        %2198 = vmatpush1.msra.mxu0 0.0
        %2199 = vmatprep.subr.mxu0 0.0
        %2200 = vmatpush1.msra.mxu0 0.0
        %2201 = vmatprep.subr.mxu0 0.0
        %2202 = vmatpush1.msra.mxu0 0.0
        %2203 = vmatprep.subr.mxu0 0.0
        %2204 = vmatpush1.msra.mxu0 0.0
        %2205 = vmatprep.subr.mxu0 0.0
        %2206 = vmatpush1.msra.mxu0 0.0
        %2207 = vmatprep.subr.mxu0 0.0
        %2208 = vmatpush1.msra.mxu0 0.0
        %2209 = vmatprep.subr.mxu0 0.0
        %2210 = vmatpush1.msra.mxu0 0.0
        %2211 = vmatprep.subr.mxu0 0.0
        %2212 = vmatpush1.msra.mxu0 0.0
        %2213 = vmatprep.mubr.f32.mxu0 0.0
        %2214 = vmatmul.mubr.f32.gmra.mrb[0].mxu0 %v2147
        %v2215 = vpop.f32.mrb[0].mxu0
        %v2216 = vadd.f32 0.0, %v2215
        %v2217 = vpop.f32.mrb[0].mxu0
        %2218 = vdwg.mxu0
        %s2219 = scalar_lea.vmem %s8, 192
        %v2220 = vld [vmem:[%s2219] sm:$0xff]
        %v2221 = vld [vmem:[%s2219 + $0x8] sm:$0xff]
        %v2222 = vld [vmem:[%s2219 + $0x10] sm:$0xff]
        %v2223 = vld [vmem:[%s2219 + $0x18] sm:$0xff]
        %v2224 = vld [vmem:[%s2219 + $0x20] sm:$0xff]
        %v2225 = vld [vmem:[%s2219 + $0x28] sm:$0xff]
        %v2226 = vld [vmem:[%s2219 + $0x30] sm:$0xff]
        %v2227 = vld [vmem:[%s2219 + $0x38] sm:$0xff]
        %v2229 = vsel %vm555, %v2216, 0
        %2231 = vmatprep.subr.mxu0 0.0
        %2232 = vmatpush1.msra.mxu0 %v2220
        %2233 = vmatprep.subr.mxu0 0.0
        %2234 = vmatpush1.msra.mxu0 %v2221
        %2235 = vmatprep.subr.mxu0 0.0
        %2236 = vmatpush1.msra.mxu0 %v2222
        %2237 = vmatprep.subr.mxu0 0.0
        %2238 = vmatpush1.msra.mxu0 %v2223
        %2239 = vmatprep.subr.mxu0 0.0
        %2240 = vmatpush1.msra.mxu0 %v2224
        %2241 = vmatprep.subr.mxu0 0.0
        %2242 = vmatpush1.msra.mxu0 %v2225
        %2243 = vmatprep.subr.mxu0 0.0
        %2244 = vmatpush1.msra.mxu0 %v2226
        %2245 = vmatprep.subr.mxu0 0.0
        %2246 = vmatpush1.msra.mxu0 %v2227
        %2247 = vmatprep.subr.mxu0 0.0
        %2248 = vmatpush1.msra.mxu0 0.0
        %2249 = vmatprep.subr.mxu0 0.0
        %2250 = vmatpush1.msra.mxu0 0.0
        %2251 = vmatprep.subr.mxu0 0.0
        %2252 = vmatpush1.msra.mxu0 0.0
        %2253 = vmatprep.subr.mxu0 0.0
        %2254 = vmatpush1.msra.mxu0 0.0
        %2255 = vmatprep.subr.mxu0 0.0
        %2256 = vmatpush1.msra.mxu0 0.0
        %2257 = vmatprep.subr.mxu0 0.0
        %2258 = vmatpush1.msra.mxu0 0.0
        %2259 = vmatprep.subr.mxu0 0.0
        %2260 = vmatpush1.msra.mxu0 0.0
        %2261 = vmatprep.subr.mxu0 0.0
        %2262 = vmatpush1.msra.mxu0 0.0
        %2263 = vmatprep.subr.mxu0 0.0
        %2264 = vmatpush1.msra.mxu0 0.0
        %2265 = vmatprep.subr.mxu0 0.0
        %2266 = vmatpush1.msra.mxu0 0.0
        %2267 = vmatprep.subr.mxu0 0.0
        %2268 = vmatpush1.msra.mxu0 0.0
        %2269 = vmatprep.subr.mxu0 0.0
        %2270 = vmatpush1.msra.mxu0 0.0
        %2271 = vmatprep.subr.mxu0 0.0
        %2272 = vmatpush1.msra.mxu0 0.0
        %2273 = vmatprep.subr.mxu0 0.0
        %2274 = vmatpush1.msra.mxu0 0.0
        %2275 = vmatprep.subr.mxu0 0.0
        %2276 = vmatpush1.msra.mxu0 0.0
        %2277 = vmatprep.subr.mxu0 0.0
        %2278 = vmatpush1.msra.mxu0 0.0
        %2279 = vmatprep.subr.mxu0 0.0
        %2280 = vmatpush1.msra.mxu0 0.0
        %2281 = vmatprep.subr.mxu0 0.0
        %2282 = vmatpush1.msra.mxu0 0.0
        %2283 = vmatprep.subr.mxu0 0.0
        %2284 = vmatpush1.msra.mxu0 0.0
        %2285 = vmatprep.subr.mxu0 0.0
        %2286 = vmatpush1.msra.mxu0 0.0
        %2287 = vmatprep.subr.mxu0 0.0
        %2288 = vmatpush1.msra.mxu0 0.0
        %2289 = vmatprep.subr.mxu0 0.0
        %2290 = vmatpush1.msra.mxu0 0.0
        %2291 = vmatprep.subr.mxu0 0.0
        %2292 = vmatpush1.msra.mxu0 0.0
        %2293 = vmatprep.subr.mxu0 0.0
        %2294 = vmatpush1.msra.mxu0 0.0
        %2295 = vmatprep.mubr.f32.mxu0 0.0
        %2296 = vmatmul.mubr.f32.gmra.mrb[0].mxu0 %v2229
        %v2297 = vpop.f32.mrb[0].mxu0
        %v2298 = vadd.f32 0.0, %v2297
        %v2299 = vpop.f32.mrb[0].mxu0
        %2300 = vdwg.mxu0
        %v2301 = vadd.f32 %v2143, %v2298
        %v2302 = vld [vmem:[%s9] sm:$0x1]
        %v2303 = vadd.f32 %v2301, %v2302
        %v2304 = vsub.f32 0.0, %v2303
        %v2305 = vmul.f32 %v2304, 1.442695
        %v2306 = vpow.pop %v2305
        %v2307 = vadd.f32 %v2306, 1.0
        %v2308 = vrcp.pop %v2307
        %v2309 = vmul.f32 1.0, %v2308
        %2310 = vst [vmem:[%s385] sm:$0x1] %v2309
        %p2311 = scmp.lt.s32.totalorder %s23, 1
        %s2312 = scalar_select %p2311, %s23, 1
        %s2313 = scalar_lea.vmem %s10, %s2312
        // Predicated region
        $region69: #{_lambda_.1} parent=59 // pred_check
          %p2314 = pneg %p256
        $region70: #{_lambda_.1} parent=59 // pred_check_branch
          %2316 = sbr.rel (%p2314) target = $region72
        $region71: #{_lambda_.1} parent=59 // pred_region
          _
        $region72: #{_lambda_.1} parent=59 // pred_fallthru
          _
      $region60: #{_lambda_.1} parent=5 // pred_fallthru
        _
      %p2317 = scmp.le.s32.totalorder 2, %s18
      // Predicated region
      $region73: #{_lambda_.1} parent=5 // pred_check
        %p2318 = pneg %p2317
      $region74: #{_lambda_.1} parent=5 // pred_check_branch
        %2320 = sbr.rel (%p2318) target = $region76
      $region75: #{_lambda_.1} parent=5 // pred_region
        %s2321 = ssub.s32 %s18, 2
        // Predicated region
        $region77: #{_lambda_.1} parent=75 // pred_check
          %p2322 = pneg %p262
        $region78: #{_lambda_.1} parent=75 // pred_check_branch
          %2324 = sbr.rel (%p2322) target = $region80
        $region79: #{_lambda_.1} parent=75 // pred_region
          %p2325 = scmp.lt.s32.totalorder %s24, 1
          %s2326 = scalar_select %p2325, %s24, 1
          %s2327 = scalar_lea.vmem %s10, %s2326
        $region80: #{_lambda_.1} parent=75 // pred_fallthru
          _
      $region76: #{_lambda_.1} parent=5 // pred_fallthru
        _
    $region6: #{_lambda_.1} parent=1 // loop_footer
      %s22 = sadd.s32 1, %s18
    $region7: #{_lambda_.1} parent=1 // loop_footer_branch
      %17 = sbr.rel target = $region3
    $region8: #{_lambda_.1} parent=1 // loop_exit
      _
    %2328 = vsyncpa [#allocation3], 1
    %s2329 = scalar_lea.sflag [#allocation3], 1
    %2330 = vsyncpa %s2329, 1
    %2331 = vsyncpa [#allocation5], 1

</llo_original>
